<compile_context>
chip_gen: v7x
topology: tpu7x:2x2x1
jax: 0.10.0
libtpu: 0.0.40
codegen_flags: <defaults>
</compile_context>

<pallas_src>
import math
from functools import partial

import jax
import jax.numpy as jnp
import numpy as np
from jax.experimental import pallas as pl
from jax.experimental.pallas import tpu as pltpu

# ---- module-level constants copied from the PyTorch script ----
max_seq_len = 100
expand_factor = 2
model_scale = 1.0
num_blocks = round(8 * math.log2(1.0 + model_scale))
qk_dim_div = 8
to_nearest_64 = lambda x: round(x / 64) * 64
residual_depth = to_nearest_64(384 * math.log2(1.0 + model_scale))
LN_EPS = 1e-5  # nn.LayerNorm default


def _round_up(x, m):
    return ((x + m - 1) // m) * m


def _latent_attention_kernel(T, qk_pad, expand_dim, e_local, scale,
                             sp_ref, x_ref, ln_w_ref, w_exp_ref,
                             w_pl_ref, w_pa_ref, o_ref):
    f32 = jnp.float32
    bf16 = jnp.bfloat16
    BB, Tp, D = x_ref.shape
    M = BB * Tp
    v_dim = expand_dim - e_local

    x = x_ref[...]                                   # (BB, Tp, D) f32, residual kept as-is
    xf = x.reshape(M, D)

    # LayerNorm(dim, bias=False): biased variance, eps=1e-5, learned gamma only (f32).
    mean = jnp.mean(xf, axis=-1, keepdims=True)
    cen = xf - mean
    var = jnp.mean(cen * cen, axis=-1, keepdims=True)
    xn = cen * jax.lax.rsqrt(var + LN_EPS) * ln_w_ref[0]

    # Single fused, 128-aligned "expand" matmul; bf16 operands, f32 accumulation.
    # Column layout: [ q (qk_pad) | k (qk_pad) | linear (e) | pre_gelu (e) ]
    h = jnp.dot(xn.astype(bf16), w_exp_ref[...], preferred_element_type=f32)
    q = h[:, :qk_pad]
    k = h[:, qk_pad:2 * qk_pad]
    lin = h[:, 2 * qk_pad:2 * qk_pad + expand_dim]
    pre = h[:, 2 * qk_pad + expand_dim:]

    # exact GELU (F.gelu default, approximate='none') -> GEGLU
    inv_sqrt2 = 1.0 / math.sqrt(2.0)
    geglu = lin * (0.5 * pre * (1.0 + jax.lax.erf(pre * inv_sqrt2)))
    geglu_local = geglu[:, :e_local].astype(bf16)              # (M, e - v)
    geglu_attn = geglu[:, e_local:].astype(bf16)               # (M, v)

    # Additive position-bias mask, built in-kernel from iota + SMEM scalar.
    # Convention (faithful to the snippet): bias on j > i, -inf elsewhere.
    # Padded key columns (j >= T) are -inf; padded query rows get a finite
    # diagonal (their outputs are never stored).
    row = jax.lax.broadcasted_iota(jnp.int32, (Tp, Tp), 0)
    col = jax.lax.broadcasted_iota(jnp.int32, (Tp, Tp), 1)
    keep = ((col > row) & (col < T)) | ((row >= T) & (col == row))
    sp = sp_ref[0]                                             # softplus(position_bias_mult)
    mask = jnp.where(keep, sp * (col - row).astype(f32), f32(-jnp.inf))

    qb = q.reshape(BB, Tp, qk_pad).astype(bf16)
    kb = k.reshape(BB, Tp, qk_pad).astype(bf16)
    vb = geglu_attn.reshape(BB, Tp, v_dim)

    scores = jnp.einsum('bqd,bkd->bqk', qb, kb,
                        preferred_element_type=f32) * scale + mask[None]
    m = jnp.max(scores, axis=-1, keepdims=True)
    p = jnp.exp(scores - m)
    denom = jnp.sum(p, axis=-1, keepdims=True)
    p = p * pl.reciprocal(denom, approx=True)
    attn = jnp.einsum('bqk,bkd->bqd', p.astype(bf16), vb,
                      preferred_element_type=f32)              # (BB, Tp, v)
    attn = attn.reshape(M, v_dim).astype(bf16)

    # output projection (project.T split into local / attention row-blocks) + residual
    out = (jnp.dot(geglu_local, w_pl_ref[...], preferred_element_type=f32)
           + jnp.dot(attn, w_pa_ref[...], preferred_element_type=f32))    # (M, D) f32
    out = out.reshape(BB, Tp, D)
    # unpadded, lane-dense store: only the T real query rows are written back
    o_ref[...] = x[:, :T, :] + out[:, :T, :]


def prepare_params(params, compute_dtype=jnp.bfloat16):
    """One-time weight prep (hoisted out of the hot path): split / transpose /
    zero-pad the fused expand weight to 128-aligned columns, cast to bf16."""
    D = params["ln_weight"].shape[0]
    qk_dim = D // qk_dim_div
    expand_dim = D * expand_factor
    e_local = expand_dim - D
    qk_pad = _round_up(qk_dim, 128)

    expand_w = params["expand"]                                # (2*qk + 2*e, D)
    wq = expand_w[:qk_dim].T                                   # (D, qk)
    wk = expand_w[qk_dim:2 * qk_dim].T                         # (D, qk)
    w_lin = expand_w[2 * qk_dim:2 * qk_dim + expand_dim].T     # (D, e)
    w_pre = expand_w[2 * qk_dim + expand_dim:].T               # (D, e)
    zpad = jnp.zeros((D, qk_pad - qk_dim), jnp.float32)
    w_exp = jnp.concatenate([wq, zpad, wk, zpad, w_lin, w_pre],
                            axis=1).astype(compute_dtype)      # (D, 2*qk_pad + 2*e)

    project_w = params["project"]                              # (D, e)
    w_proj_local = project_w[:, :e_local].T.astype(compute_dtype)   # (e - v, D)
    w_proj_attn = project_w[:, e_local:].T.astype(compute_dtype)    # (v, D)

    return {
        "ln_w": params["ln_weight"].reshape(1, D).astype(jnp.float32),
        "w_exp": w_exp,
        "w_proj_local": w_proj_local,
        "w_proj_attn": w_proj_attn,
        "softplus_pbm": jax.nn.softplus(
            params["position_bias_mult"]).reshape(1).astype(jnp.float32),
    }


def _pick_batch_block(B, max_bb=4):
    divisors = [d for d in range(1, min(B, max_bb) + 1) if B % d == 0]
    # prefer leaving >= 2 grid steps so both v7x TensorCores get work
    multi_step = [d for d in divisors if B // d >= 2]
    return max(multi_step) if multi_step else max(divisors)


def latent_attention_block(x, prepared, *, batch_block=None):
    """Pallas implementation of LatentAttentionBlock.forward. x: (B, T, D) f32."""
    B, T, D = x.shape
    ln_w = prepared["ln_w"]
    w_exp = prepared["w_exp"]
    w_pl = prepared["w_proj_local"]
    w_pa = prepared["w_proj_attn"]
    sp = prepared["softplus_pbm"]

    qk_dim = D // qk_dim_div
    expand_dim = D * expand_factor
    e_local = w_pl.shape[0]
    v_dim = w_pa.shape[0]
    qk_pad = (w_exp.shape[1] - 2 * expand_dim) // 2

    Tp = _round_up(T, 128)                         # lane-dense (T,T) scores & clean tiling
    BB = batch_block if batch_block is not None else _pick_batch_block(B)
    assert B % BB == 0

    xp = x if Tp == T else jnp.pad(x, ((0, 0), (0, Tp - T), (0, 0)))

    # TODO(synk): position_bias_base / negative_infinity_matrix_base are undefined
    # globals in the source snippet; using pbb[i, j] = j - i and an all -inf matrix
    # (same convention as the previously validated kernel). As written, the last
    # real query row is fully masked (-inf) -> NaN, faithful to the snippet.
    kernel = partial(_latent_attention_kernel, T, qk_pad, expand_dim, e_local,
                     1.0 / math.sqrt(qk_dim))
    grid_spec = pltpu.PrefetchScalarGridSpec(
        num_scalar_prefetch=0,
        grid=(B // BB,),
        in_specs=[
            pl.BlockSpec(memory_space=pltpu.MemorySpace.SMEM),       # softplus(pbm) scalar
            pl.BlockSpec((BB, Tp, D), lambda b: (b, 0, 0)),          # x (T-padded)
            pl.BlockSpec((1, D), lambda b: (0, 0)),                  # layernorm gamma
            pl.BlockSpec((D, w_exp.shape[1]), lambda b: (0, 0)),     # fused expand weight
            pl.BlockSpec((e_local, D), lambda b: (0, 0)),            # project.T (local rows)
            pl.BlockSpec((v_dim, D), lambda b: (0, 0)),              # project.T (attn rows)
        ],
        out_specs=pl.BlockSpec((BB, T, D), lambda b: (b, 0, 0)),     # unpadded output
    )
    return pl.pallas_call(
        kernel,
        out_shape=jax.ShapeDtypeStruct((B, T, D), jnp.float32),
        grid_spec=grid_spec,
        compiler_params=pltpu.CompilerParams(
            dimension_semantics=("parallel",),
            vmem_limit_bytes=64 * 1024 * 1024),
    )(sp, xp, ln_w, w_exp, w_pl, w_pa)


def reference_forward(x, params):
    """Pure-JAX f32 reference matching the PyTorch forward semantics."""
    B, T, D = x.shape
    qk_dim = D // qk_dim_div
    v_dim = D
    expand_dim = D * expand_factor
    residual = x

    idx = jnp.arange(T)
    causal = idx[None, :] > idx[:, None]
    pbb = (idx[None, :] - idx[:, None]).astype(jnp.float32)
    attn_mask = jnp.where(causal,
                          jax.nn.softplus(params["position_bias_mult"]) * pbb,
                          jnp.float32(-jnp.inf))

    mean = jnp.mean(x, axis=-1, keepdims=True)
    var = jnp.mean((x - mean) ** 2, axis=-1, keepdims=True)
    xn = (x - mean) / jnp.sqrt(var + LN_EPS) * params["ln_weight"]

    h = xn @ params["expand"].T
    q, k, lin, pre = jnp.split(h, [qk_dim, 2 * qk_dim, 2 * qk_dim + expand_dim], axis=-1)
    geglu = lin * jax.nn.gelu(pre, approximate=False)
    geglu_local = geglu[..., :expand_dim - v_dim]
    geglu_attn_value = geglu[..., expand_dim - v_dim:]

    scores = (q @ jnp.swapaxes(k, -1, -2)) / math.sqrt(qk_dim) + attn_mask
    p = jax.nn.softmax(scores, axis=-1)
    attn = p @ geglu_attn_value

    out = jnp.concatenate([geglu_local, attn], axis=-1) @ params["project"].T
    return residual + out


if __name__ == "__main__":
    B, T, D = 2, 8, 64                      # small shapes; D % qk_dim_div == 0
    qk_dim = D // qk_dim_div
    expand_dim = D * expand_factor

    key = jax.random.PRNGKey(0)
    kx, ke, kp = jax.random.split(key, 3)

    # deterministic parameter init mirroring the module's __init__ scales
    params = {
        "ln_weight": jnp.ones((D,), jnp.float32),
        "expand": (0.5 * (1.0 / residual_depth ** 0.5) * (1.0 / expand_factor)
                   * jax.random.normal(ke, (2 * qk_dim + 2 * expand_dim, D), jnp.float32)),
        "project": (1.0 * (1.0 / residual_depth ** 0.5) * (1.0 / expand_factor)
                    * (1.0 / num_blocks)
                    * jax.random.normal(kp, (D, expand_dim), jnp.float32)),
        "position_bias_mult": jnp.float32(1.0),
    }
    x = jax.random.normal(kx, (B, T, D), jnp.float32)

    prepared = prepare_params(params)       # one-time weight prep, outside the hot path
    fwd = jax.jit(latent_attention_block)
    y = jax.block_until_ready(fwd(x, prepared))
    y_ref = jax.block_until_ready(reference_forward(x, params))

    # last real query row is NaN by construction of the snippet's mask -> equal_nan=True;
    # bf16 MXU operands => slightly relaxed tolerance vs. the pure-f32 reference.
    err = np.abs(np.asarray(y) - np.asarray(y_ref))
    assert np.allclose(np.asarray(y), np.asarray(y_ref),
                       atol=1e-2, rtol=1e-2, equal_nan=True), float(np.nanmax(err))
    print("KERNEL_OK")
</pallas_src>

<mosaic_0001>
module attributes {stable_mosaic.version = 11 : i64} {
  func.func @_latent_attention_kernel(%arg0: i32, %arg1: memref<1xf32, #tpu.memory_space<smem>>, %arg2: memref<1x128x64xf32, #tpu.memory_space<vmem>>, %arg3: memref<1x64xf32, #tpu.memory_space<vmem>>, %arg4: memref<64x512xbf16, #tpu.memory_space<vmem>>, %arg5: memref<64x64xbf16, #tpu.memory_space<vmem>>, %arg6: memref<64x64xbf16, #tpu.memory_space<vmem>>, %arg7: memref<1x8x64xf32, #tpu.memory_space<vmem>>) attributes {dimension_semantics = [#tpu.dimension_semantics<parallel>], iteration_bounds = array<i64: 2>, scalar_prefetch = 0 : i64, scratch_operands = 0 : i64, tpu.core_type = #tpu.core_type<tc>, window_params = [{transform_indices = @transform_0, window_bounds = array<i64: 1>}, {transform_indices = @transform_1, window_bounds = array<i64: 1, 128, 64>}, {pipeline_mode = #tpu.pipeline_mode<synchronous>, transform_indices = @transform_2, window_bounds = array<i64: 1, 64>}, {pipeline_mode = #tpu.pipeline_mode<synchronous>, transform_indices = @transform_3, window_bounds = array<i64: 64, 512>}, {pipeline_mode = #tpu.pipeline_mode<synchronous>, transform_indices = @transform_4, window_bounds = array<i64: 64, 64>}, {pipeline_mode = #tpu.pipeline_mode<synchronous>, transform_indices = @transform_5, window_bounds = array<i64: 64, 64>}, {transform_indices = @transform_6, window_bounds = array<i64: 1, 8, 64>}]} {
    %c0 = arith.constant 0 : index
    %c0_0 = arith.constant 0 : index
    %c0_1 = arith.constant 0 : index
    %0 = vector.load %arg2[%c0, %c0_0, %c0_1] : memref<1x128x64xf32, #tpu.memory_space<vmem>>, vector<1x128x64xf32>
    %1 = vector.shape_cast %0 : vector<1x128x64xf32> to vector<128x64xf32>
    %cst = arith.constant dense<0.000000e+00> : vector<128xf32>
    %2 = vector.multi_reduction <add>, %1, %cst [1] : vector<128x64xf32> to vector<128xf32>
    %3 = vector.shape_cast %2 : vector<128xf32> to vector<128x1xf32>
    %cst_2 = arith.constant 6.400000e+01 : f32
    %4 = vector.broadcast %cst_2 : f32 to vector<128x1xf32>
    %5 = arith.divf %3, %4 : vector<128x1xf32>
    %6 = vector.broadcast %5 : vector<128x1xf32> to vector<128x64xf32>
    %7 = arith.subf %1, %6 : vector<128x64xf32>
    %8 = arith.mulf %7, %7 : vector<128x64xf32>
    %cst_3 = arith.constant dense<0.000000e+00> : vector<128xf32>
    %9 = vector.multi_reduction <add>, %8, %cst_3 [1] : vector<128x64xf32> to vector<128xf32>
    %10 = vector.shape_cast %9 : vector<128xf32> to vector<128x1xf32>
    %cst_4 = arith.constant 6.400000e+01 : f32
    %11 = vector.broadcast %cst_4 : f32 to vector<128x1xf32>
    %12 = arith.divf %10, %11 : vector<128x1xf32>
    %cst_5 = arith.constant 9.99999974E-6 : f32
    %13 = vector.broadcast %cst_5 : f32 to vector<128x1xf32>
    %14 = arith.addf %12, %13 : vector<128x1xf32>
    %15 = math.rsqrt %14 : vector<128x1xf32>
    %16 = vector.broadcast %15 : vector<128x1xf32> to vector<128x64xf32>
    %17 = arith.mulf %7, %16 : vector<128x64xf32>
    %c0_6 = arith.constant 0 : index
    %c0_7 = arith.constant 0 : index
    %18 = vector.load %arg3[%c0_6, %c0_7] : memref<1x64xf32, #tpu.memory_space<vmem>>, vector<1x64xf32>
    %19 = vector.shape_cast %18 : vector<1x64xf32> to vector<64xf32>
    %20 = vector.shape_cast %19 : vector<64xf32> to vector<1x64xf32>
    %21 = vector.broadcast %20 : vector<1x64xf32> to vector<128x64xf32>
    %22 = arith.mulf %17, %21 : vector<128x64xf32>
    %23 = arith.truncf %22 : vector<128x64xf32> to vector<128x64xbf16>
    %c0_8 = arith.constant 0 : index
    %c0_9 = arith.constant 0 : index
    %24 = vector.load %arg4[%c0_8, %c0_9] : memref<64x512xbf16, #tpu.memory_space<vmem>>, vector<64x512xbf16>
    %cst_10 = arith.constant dense<0.000000e+00> : vector<128x512xf32>
    %25 = tpu.matmul %23, %24, %cst_10 {dimension_numbers = #tpu.dot_dimension_numbers<[1], [0], [0], [1], [0, 0, 1, 1], [], []>} : vector<128x64xbf16>, vector<64x512xbf16>, vector<128x512xf32> -> vector<128x512xf32>
    %26 = vector.extract_strided_slice %25 {offsets = [0, 0], sizes = [128, 128], strides = [1, 1]} : vector<128x512xf32> to vector<128x128xf32>
    %27 = vector.extract_strided_slice %25 {offsets = [0, 128], sizes = [128, 128], strides = [1, 1]} : vector<128x512xf32> to vector<128x128xf32>
    %28 = vector.extract_strided_slice %25 {offsets = [0, 256], sizes = [128, 128], strides = [1, 1]} : vector<128x512xf32> to vector<128x128xf32>
    %29 = vector.extract_strided_slice %25 {offsets = [0, 384], sizes = [128, 128], strides = [1, 1]} : vector<128x512xf32> to vector<128x128xf32>
    %cst_11 = arith.constant 5.000000e-01 : f32
    %30 = vector.broadcast %cst_11 : f32 to vector<128x128xf32>
    %31 = arith.mulf %30, %29 : vector<128x128xf32>
    %cst_12 = arith.constant 0.707106769 : f32
    %32 = vector.broadcast %cst_12 : f32 to vector<128x128xf32>
    %33 = arith.mulf %29, %32 : vector<128x128xf32>
    %34 = math.erf %33 : vector<128x128xf32>
    %cst_13 = arith.constant 1.000000e+00 : f32
    %35 = vector.broadcast %cst_13 : f32 to vector<128x128xf32>
    %36 = arith.addf %35, %34 : vector<128x128xf32>
    %37 = arith.mulf %31, %36 : vector<128x128xf32>
    %38 = arith.mulf %28, %37 : vector<128x128xf32>
    %39 = vector.extract_strided_slice %38 {offsets = [0, 0], sizes = [128, 64], strides = [1, 1]} : vector<128x128xf32> to vector<128x64xf32>
    %40 = arith.truncf %39 : vector<128x64xf32> to vector<128x64xbf16>
    %41 = vector.extract_strided_slice %38 {offsets = [0, 64], sizes = [128, 64], strides = [1, 1]} : vector<128x128xf32> to vector<128x64xf32>
    %42 = arith.truncf %41 : vector<128x64xf32> to vector<128x64xbf16>
    %43 = tpu.iota {dimensions = array<i32: 0>} : vector<128x128xi32>
    %44 = tpu.iota {dimensions = array<i32: 1>} : vector<128x128xi32>
    %45 = arith.cmpi sgt, %44, %43 : vector<128x128xi32>
    %c8_i32 = arith.constant 8 : i32
    %46 = vector.broadcast %c8_i32 : i32 to vector<128x128xi32>
    %47 = arith.cmpi slt, %44, %46 : vector<128x128xi32>
    %48 = arith.andi %45, %47 : vector<128x128xi1>
    %c8_i32_14 = arith.constant 8 : i32
    %49 = vector.broadcast %c8_i32_14 : i32 to vector<128x128xi32>
    %50 = arith.cmpi sge, %43, %49 : vector<128x128xi32>
    %51 = arith.cmpi eq, %44, %43 : vector<128x128xi32>
    %52 = arith.andi %50, %51 : vector<128x128xi1>
    %53 = arith.ori %48, %52 : vector<128x128xi1>
    %c0_15 = arith.constant 0 : index
    %54 = memref.load %arg1[%c0_15] : memref<1xf32, #tpu.memory_space<smem>>
    %55 = arith.subi %44, %43 : vector<128x128xi32>
    %56 = arith.sitofp %55 : vector<128x128xi32> to vector<128x128xf32>
    %57 = vector.broadcast %54 : f32 to vector<128x128xf32>
    %58 = arith.mulf %57, %56 : vector<128x128xf32>
    %cst_16 = arith.constant 0xFF800000 : f32
    %59 = vector.broadcast %cst_16 : f32 to vector<128x128xf32>
    %60 = arith.select %53, %58, %59 : vector<128x128xi1>, vector<128x128xf32>
    %61 = vector.shape_cast %26 : vector<128x128xf32> to vector<1x128x128xf32>
    %62 = arith.truncf %61 : vector<1x128x128xf32> to vector<1x128x128xbf16>
    %63 = vector.shape_cast %27 : vector<128x128xf32> to vector<1x128x128xf32>
    %64 = arith.truncf %63 : vector<1x128x128xf32> to vector<1x128x128xbf16>
    %65 = vector.shape_cast %42 : vector<128x64xbf16> to vector<1x128x64xbf16>
    "tpu.trace_start"() <{level = 10 : i32, message = "bqd,bkd->bqk"}> : () -> ()
    %cst_17 = arith.constant dense<0.000000e+00> : vector<1x128x128xf32>
    %66 = tpu.matmul %62, %64, %cst_17 {dimension_numbers = #tpu.dot_dimension_numbers<[2], [2], [1], [1], [0, 0, 0, 1, 1, 1], [0], [0]>} : vector<1x128x128xbf16>, vector<1x128x128xbf16>, vector<1x128x128xf32> -> vector<1x128x128xf32>
    "tpu.trace_stop"() : () -> ()
    %cst_18 = arith.constant 0.353553385 : f32
    %67 = vector.broadcast %cst_18 : f32 to vector<1x128x128xf32>
    %68 = arith.mulf %66, %67 : vector<1x128x128xf32>
    %69 = vector.shape_cast %60 : vector<128x128xf32> to vector<1x128x128xf32>
    %70 = arith.addf %68, %69 : vector<1x128x128xf32>
    %cst_19 = arith.constant dense<0xFF800000> : vector<1x128xf32>
    %71 = vector.multi_reduction <maximumf>, %70, %cst_19 [2] : vector<1x128x128xf32> to vector<1x128xf32>
    %72 = vector.shape_cast %71 : vector<1x128xf32> to vector<1x128x1xf32>
    %73 = vector.broadcast %72 : vector<1x128x1xf32> to vector<1x128x128xf32>
    %74 = arith.subf %70, %73 : vector<1x128x128xf32>
    %75 = math.exp %74 : vector<1x128x128xf32>
    %cst_20 = arith.constant dense<0.000000e+00> : vector<1x128xf32>
    %76 = vector.multi_reduction <add>, %75, %cst_20 [2] : vector<1x128x128xf32> to vector<1x128xf32>
    %77 = vector.shape_cast %76 : vector<1x128xf32> to vector<1x128x1xf32>
    %78 = tpu.reciprocal %77 {approx = true} : vector<1x128x1xf32> -> vector<1x128x1xf32>
    %79 = vector.broadcast %78 : vector<1x128x1xf32> to vector<1x128x128xf32>
    %80 = arith.mulf %75, %79 : vector<1x128x128xf32>
    %81 = arith.truncf %80 : vector<1x128x128xf32> to vector<1x128x128xbf16>
    "tpu.trace_start"() <{level = 10 : i32, message = "bqk,bkd->bqd"}> : () -> ()
    %cst_21 = arith.constant dense<0.000000e+00> : vector<1x128x64xf32>
    %82 = tpu.matmul %81, %65, %cst_21 {dimension_numbers = #tpu.dot_dimension_numbers<[2], [1], [1], [2], [0, 0, 0, 1, 1, 2], [0], [0]>} : vector<1x128x128xbf16>, vector<1x128x64xbf16>, vector<1x128x64xf32> -> vector<1x128x64xf32>
    "tpu.trace_stop"() : () -> ()
    %83 = vector.shape_cast %82 : vector<1x128x64xf32> to vector<128x64xf32>
    %84 = arith.truncf %83 : vector<128x64xf32> to vector<128x64xbf16>
    %c0_22 = arith.constant 0 : index
    %c0_23 = arith.constant 0 : index
    %85 = vector.load %arg5[%c0_22, %c0_23] : memref<64x64xbf16, #tpu.memory_space<vmem>>, vector<64x64xbf16>
    %cst_24 = arith.constant dense<0.000000e+00> : vector<128x64xf32>
    %86 = tpu.matmul %40, %85, %cst_24 {dimension_numbers = #tpu.dot_dimension_numbers<[1], [0], [0], [1], [0, 0, 1, 1], [], []>} : vector<128x64xbf16>, vector<64x64xbf16>, vector<128x64xf32> -> vector<128x64xf32>
    %c0_25 = arith.constant 0 : index
    %c0_26 = arith.constant 0 : index
    %87 = vector.load %arg6[%c0_25, %c0_26] : memref<64x64xbf16, #tpu.memory_space<vmem>>, vector<64x64xbf16>
    %cst_27 = arith.constant dense<0.000000e+00> : vector<128x64xf32>
    %88 = tpu.matmul %84, %87, %cst_27 {dimension_numbers = #tpu.dot_dimension_numbers<[1], [0], [0], [1], [0, 0, 1, 1], [], []>} : vector<128x64xbf16>, vector<64x64xbf16>, vector<128x64xf32> -> vector<128x64xf32>
    %89 = arith.addf %86, %88 : vector<128x64xf32>
    %90 = vector.shape_cast %89 : vector<128x64xf32> to vector<1x128x64xf32>
    %91 = vector.extract_strided_slice %0 {offsets = [0, 0, 0], sizes = [1, 8, 64], strides = [1, 1, 1]} : vector<1x128x64xf32> to vector<1x8x64xf32>
    %92 = vector.extract_strided_slice %90 {offsets = [0, 0, 0], sizes = [1, 8, 64], strides = [1, 1, 1]} : vector<1x128x64xf32> to vector<1x8x64xf32>
    %93 = arith.addf %91, %92 : vector<1x8x64xf32>
    %c0_28 = arith.constant 0 : index
    %c0_29 = arith.constant 0 : index
    %c0_30 = arith.constant 0 : index
    %94 = vector.load %arg7[%c0_28, %c0_29, %c0_30] : memref<1x8x64xf32, #tpu.memory_space<vmem>>, vector<1x8x64xf32>
    tpu.vector_store %arg7[%c0_28, %c0_29, %c0_30], %93 {strides = array<i32>} : memref<1x8x64xf32, #tpu.memory_space<vmem>>, vector<1x8x64xf32>,
    return
  }
  func.func @transform_0(%arg0: i32) -> i32 {
    %c0_i32 = arith.constant 0 : i32
    %c0_i32_0 = arith.constant 0 : i32
    return %c0_i32 : i32
  }
  func.func @transform_1(%arg0: i32) -> (i32, i32, i32) {
    %c0_i32 = arith.constant 0 : i32
    %c0_i32_0 = arith.constant 0 : i32
    %c0_i32_1 = arith.constant 0 : i32
    return %arg0, %c0_i32, %c0_i32_0 : i32, i32, i32
  }
  func.func @transform_2(%arg0: i32) -> (i32, i32) {
    %c0_i32 = arith.constant 0 : i32
    %c0_i32_0 = arith.constant 0 : i32
    %c0_i32_1 = arith.constant 0 : i32
    return %c0_i32, %c0_i32_0 : i32, i32
  }
  func.func @transform_3(%arg0: i32) -> (i32, i32) {
    %c0_i32 = arith.constant 0 : i32
    %c0_i32_0 = arith.constant 0 : i32
    %c0_i32_1 = arith.constant 0 : i32
    return %c0_i32, %c0_i32_0 : i32, i32
  }
  func.func @transform_4(%arg0: i32) -> (i32, i32) {
    %c0_i32 = arith.constant 0 : i32
    %c0_i32_0 = arith.constant 0 : i32
    %c0_i32_1 = arith.constant 0 : i32
    return %c0_i32, %c0_i32_0 : i32, i32
  }
  func.func @transform_5(%arg0: i32) -> (i32, i32) {
    %c0_i32 = arith.constant 0 : i32
    %c0_i32_0 = arith.constant 0 : i32
    %c0_i32_1 = arith.constant 0 : i32
    return %c0_i32, %c0_i32_0 : i32, i32
  }
  func.func @transform_6(%arg0: i32) -> (i32, i32, i32) {
    %c0_i32 = arith.constant 0 : i32
    %c0_i32_0 = arith.constant 0 : i32
    %c0_i32_1 = arith.constant 0 : i32
    return %arg0, %c0_i32, %c0_i32_0 : i32, i32, i32
  }
}

</mosaic_0001>

<llo_original>
// kernel: latent_attention_block.1
$region0: #{latent_attention_block.1}
  #allocation0 [shape = 'u32[]', space=smem, size = 0x4, offset = 0x4, fixed_abs, tag = 'smem constant byte address 0x4 - core index']
  #allocation1 [shape = 'u32[144,128]{1,0:T(1,128)}', space=vmem, size = 0x12000, scoped, tag = 'internal scratch']
  #allocation2 [shape = 'f32[1]{0:T(128)S(6)}', space=smem, size = 0x200, scoped, tag = 'scoped memory for latent_attention_block.1']
  %s0 = inlined_call_operand.<no memory space> [shape: f32[1], index: 0, kind: input, shape index: {}]
  %s1 = inlined_call_operand.hbm [shape: f32[2,128,64], index: 1, kind: input, shape index: {}]
  %s2 = inlined_call_operand.hbm [shape: f32[1,64], index: 2, kind: input, shape index: {}]
  %s3 = inlined_call_operand.hbm [shape: bf16[64,512], index: 3, kind: input, shape index: {}]
  %s4 = inlined_call_operand.hbm [shape: bf16[64,64], index: 4, kind: input, shape index: {}]
  %s5 = inlined_call_operand.hbm [shape: bf16[64,64], index: 5, kind: input, shape index: {}]
  %s6 = inlined_call_operand.hbm [shape: f32[2,8,64], index: 6, kind: output, shape index: {}]
  %s7 = sld [smem:[#allocation0]]
  $region77: #{latent_attention_block.1} parent=0
    _
  %s9 = ssub.s32 1, %s7
  %s10 = scalar_select 0, %s9, %s7
  %11 = sst [smem:[#allocation2]] %s0
  $region1: #{latent_attention_block.1} parent=0
    #allocation3 [shape = 'u8[131072]{0}', space=vmem, size = 0x20000, scoped, tag = 'input window, operand 1']
    #allocation4 [shape = 's32[2]{0}', space=sflag, size = 0x8, scoped, tag = 'scoped memory for latent_attention_block.1']
    #allocation5 [shape = 's32[2]{0}', space=sflag, size = 0x8, scoped, tag = 'scoped memory for latent_attention_block.1']
    #allocation6 [shape = 'u8[512]{0}', space=vmem, size = 0x400, scoped, tag = 'input window, operand 2, single buffered']
    #allocation7 [shape = 's32[1]{0}', space=sflag, size = 0x4, scoped, tag = 'scoped memory for latent_attention_block.1']
    #allocation8 [shape = 'u8[65536]{0}', space=vmem, size = 0x10000, scoped, tag = 'input window, operand 3, single buffered']
    #allocation9 [shape = 'u8[16384]{0}', space=vmem, size = 0x4000, scoped, tag = 'input window, operand 4, single buffered']
    #allocation10 [shape = 's32[1]{0}', space=sflag, size = 0x4, scoped, tag = 'scoped memory for latent_attention_block.1']
    #allocation11 [shape = 'u8[16384]{0}', space=vmem, size = 0x4000, scoped, tag = 'input window, operand 5, single buffered']
    #allocation12 [shape = 'u8[8192]{0}', space=vmem, size = 0x2000, scoped, tag = 'output window, operand 0']
    %12 = vsyncpa [#allocation4], 0
    %s13 = scalar_lea.sflag [#allocation4], 1
    %14 = vsyncpa %s13, 0
    %15 = vsyncpa [#allocation7], 0
    %16 = vsyncpa [#allocation10], 0
    %17 = vsyncpa [#allocation5], 0
    %s18 = scalar_lea.sflag [#allocation5], 1
    %19 = vsyncpa %s18, 0
    loop: start=0, step=1, limit=4
    $region2: #{latent_attention_block.1} parent=1 // loop_pre_header
      _
    $region3: #{latent_attention_block.1} parent=1 // loop_header
      %s21 = sphi 0, %s25
      %p22 = scmp.ge.s32.totalorder %s21, 4
      %s29 = sphi 0, %s29
      %s31 = sphi 0, %s29
      %s32 = sphi 0, %s31
      %s46 = sphi 0, %s32
      %s52 = sphi 0, %s54
      %s55 = sphi 0, %s52
      %s56 = sphi 0, %s55
      %s72 = sphi 0, %s56
      %s76 = sphi 0, %s76
      %s78 = sphi 0, %s76
      %s79 = sphi 0, %s78
      %s93 = sphi 0, %s79
      %s97 = sphi 0, %s97
      %s99 = sphi 0, %s97
      %s100 = sphi 0, %s99
      %s114 = sphi 0, %s100
      %s118 = sphi 0, %s118
      %s120 = sphi 0, %s118
      %s121 = sphi 0, %s120
      %s135 = sphi 0, %s121
      %s139 = sphi 0, %s139
      %s141 = sphi 0, %s139
      %s142 = sphi 0, %s141
      %s156 = sphi 0, %s142
      %s162 = sphi 0, %s164
      %s165 = sphi 0, %s162
      %s166 = sphi 0, %s165
      %s182 = sphi 0, %s166
    $region4: #{latent_attention_block.1} parent=1 // loop_header_branch
      %24 = sbr.rel (%p22) target = $region8
    $region5: #{latent_attention_block.1} parent=1 // loop_body
      %s26 = ssub.s32 %s21, 1
      %s27 = ssub.s32 %s21, 2
      %s28 = sadd.s32 %s21, 1
      %s30 = sadd.s32 %s29, 1
      %p33 = scmp.eq.s32.totalorder %s21, 1
      %p34 = scmp.ne.s32.totalorder %s29, %s31
      %p35 = scmp.eq.s32.totalorder %s21, 0
      %p36 = por %p34, %p35
      %p37 = scmp.ne.s32.totalorder %s29, %s31
      %p38 = scmp.eq.s32.totalorder %s26, 1
      %p39 = por %p37, %p38
      %p40 = scmp.ne.s32.totalorder %s31, %s32
      %p41 = scmp.eq.s32.totalorder %s26, 0
      %p42 = por %p40, %p41
      %p43 = scmp.ne.s32.totalorder %s31, %s32
      %p44 = scmp.eq.s32.totalorder %s27, 1
      %p45 = por %p43, %p44
      %p47 = scmp.ne.s32.totalorder %s32, %s46
      %p48 = scmp.eq.s32.totalorder %s27, 0
      %p49 = por %p47, %p48
      %s50 = ssub.s32 %s21, %s28
      %p51 = scmp.eq.s32.totalorder %s50, 0
      %s53 = sadd.s32 %s52, 1
      %s54 = scalar_select %p51, %s52, %s53
      %p57 = pneg %p51
      %p58 = scmp.eq.s32.totalorder %s21, 1
      %p59 = por %p57, %p58
      %p60 = scmp.ne.s32.totalorder %s52, %s55
      %p61 = scmp.eq.s32.totalorder %s21, 0
      %p62 = por %p60, %p61
      %p63 = scmp.ne.s32.totalorder %s52, %s55
      %p64 = scmp.eq.s32.totalorder %s26, 1
      %p65 = por %p63, %p64
      %p66 = scmp.ne.s32.totalorder %s55, %s56
      %p67 = scmp.eq.s32.totalorder %s26, 0
      %p68 = por %p66, %p67
      %p69 = scmp.ne.s32.totalorder %s55, %s56
      %p70 = scmp.eq.s32.totalorder %s27, 1
      %p71 = por %p69, %p70
      %p73 = scmp.ne.s32.totalorder %s56, %s72
      %p74 = scmp.eq.s32.totalorder %s27, 0
      %p75 = por %p73, %p74
      %s77 = sadd.s32 %s76, 1
      %p80 = scmp.eq.s32.totalorder %s21, 1
      %p81 = scmp.ne.s32.totalorder %s76, %s78
      %p82 = scmp.eq.s32.totalorder %s21, 0
      %p83 = por %p81, %p82
      %p84 = scmp.ne.s32.totalorder %s76, %s78
      %p85 = scmp.eq.s32.totalorder %s26, 1
      %p86 = por %p84, %p85
      %p87 = scmp.ne.s32.totalorder %s78, %s79
      %p88 = scmp.eq.s32.totalorder %s26, 0
      %p89 = por %p87, %p88
      %p90 = scmp.ne.s32.totalorder %s78, %s79
      %p91 = scmp.eq.s32.totalorder %s27, 1
      %p92 = por %p90, %p91
      %p94 = scmp.ne.s32.totalorder %s79, %s93
      %p95 = scmp.eq.s32.totalorder %s27, 0
      %p96 = por %p94, %p95
      %s98 = sadd.s32 %s97, 1
      %p101 = scmp.eq.s32.totalorder %s21, 1
      %p102 = scmp.ne.s32.totalorder %s97, %s99
      %p103 = scmp.eq.s32.totalorder %s21, 0
      %p104 = por %p102, %p103
      %p105 = scmp.ne.s32.totalorder %s97, %s99
      %p106 = scmp.eq.s32.totalorder %s26, 1
      %p107 = por %p105, %p106
      %p108 = scmp.ne.s32.totalorder %s99, %s100
      %p109 = scmp.eq.s32.totalorder %s26, 0
      %p110 = por %p108, %p109
      %p111 = scmp.ne.s32.totalorder %s99, %s100
      %p112 = scmp.eq.s32.totalorder %s27, 1
      %p113 = por %p111, %p112
      %p115 = scmp.ne.s32.totalorder %s100, %s114
      %p116 = scmp.eq.s32.totalorder %s27, 0
      %p117 = por %p115, %p116
      %s119 = sadd.s32 %s118, 1
      %p122 = scmp.eq.s32.totalorder %s21, 1
      %p123 = scmp.ne.s32.totalorder %s118, %s120
      %p124 = scmp.eq.s32.totalorder %s21, 0
      %p125 = por %p123, %p124
      %p126 = scmp.ne.s32.totalorder %s118, %s120
      %p127 = scmp.eq.s32.totalorder %s26, 1
      %p128 = por %p126, %p127
      %p129 = scmp.ne.s32.totalorder %s120, %s121
      %p130 = scmp.eq.s32.totalorder %s26, 0
      %p131 = por %p129, %p130
      %p132 = scmp.ne.s32.totalorder %s120, %s121
      %p133 = scmp.eq.s32.totalorder %s27, 1
      %p134 = por %p132, %p133
      %p136 = scmp.ne.s32.totalorder %s121, %s135
      %p137 = scmp.eq.s32.totalorder %s27, 0
      %p138 = por %p136, %p137
      %s140 = sadd.s32 %s139, 1
      %p143 = scmp.eq.s32.totalorder %s21, 1
      %p144 = scmp.ne.s32.totalorder %s139, %s141
      %p145 = scmp.eq.s32.totalorder %s21, 0
      %p146 = por %p144, %p145
      %p147 = scmp.ne.s32.totalorder %s139, %s141
      %p148 = scmp.eq.s32.totalorder %s26, 1
      %p149 = por %p147, %p148
      %p150 = scmp.ne.s32.totalorder %s141, %s142
      %p151 = scmp.eq.s32.totalorder %s26, 0
      %p152 = por %p150, %p151
      %p153 = scmp.ne.s32.totalorder %s141, %s142
      %p154 = scmp.eq.s32.totalorder %s27, 1
      %p155 = por %p153, %p154
      %p157 = scmp.ne.s32.totalorder %s142, %s156
      %p158 = scmp.eq.s32.totalorder %s27, 0
      %p159 = por %p157, %p158
      %s160 = ssub.s32 %s21, %s28
      %p161 = scmp.eq.s32.totalorder %s160, 0
      %s163 = sadd.s32 %s162, 1
      %s164 = scalar_select %p161, %s162, %s163
      %p167 = pneg %p161
      %p168 = scmp.eq.s32.totalorder %s21, 1
      %p169 = por %p167, %p168
      %p170 = scmp.ne.s32.totalorder %s162, %s165
      %p171 = scmp.eq.s32.totalorder %s21, 0
      %p172 = por %p170, %p171
      %p173 = scmp.ne.s32.totalorder %s162, %s165
      %p174 = scmp.eq.s32.totalorder %s26, 1
      %p175 = por %p173, %p174
      %p176 = scmp.ne.s32.totalorder %s165, %s166
      %p177 = scmp.eq.s32.totalorder %s26, 0
      %p178 = por %p176, %p177
      %p179 = scmp.ne.s32.totalorder %s165, %s166
      %p180 = scmp.eq.s32.totalorder %s27, 1
      %p181 = por %p179, %p180
      %p183 = scmp.ne.s32.totalorder %s166, %s182
      %p184 = scmp.eq.s32.totalorder %s27, 0
      %p185 = por %p183, %p184
      %p186 = scmp.le.s32.totalorder 1, %s21
      %p187 = scmp.lt.s32.totalorder %s21, 3
      %p188 = pnand %p186, %p187
      %p189 = pneg %p188
      // Predicated region
      $region9: #{latent_attention_block.1} parent=5 // pred_check
        _
      $region10: #{latent_attention_block.1} parent=5 // pred_check_branch
        %191 = sbr.rel (%p188) target = $region12
      $region11: #{latent_attention_block.1} parent=5 // pred_region
        %s192 = ssub.s32 %s21, 1
        // Predicated region
        $region13: #{latent_attention_block.1} parent=11 // pred_check
          %p193 = pneg %p42
        $region14: #{latent_attention_block.1} parent=11 // pred_check_branch
          %195 = sbr.rel (%p193) target = $region16
        $region15: #{latent_attention_block.1} parent=11 // pred_region
          _
        $region16: #{latent_attention_block.1} parent=11 // pred_fallthru
          _
        // Predicated region
        $region17: #{latent_attention_block.1} parent=11 // pred_check
          %p196 = pneg %p89
        $region18: #{latent_attention_block.1} parent=11 // pred_check_branch
          %198 = sbr.rel (%p196) target = $region20
        $region19: #{latent_attention_block.1} parent=11 // pred_region
          %s200 = ssub.s32 16, 16
          %201 = vsyncadd [#allocation7], %s200
          %s203 = sshll.u32 [#allocation6], 4
          %s204 = int_to_ptr.vmem [resolvable:$true] %s203
          %206 = dma.hbm_to_vmem [thread:$0]  %s2, 16, %s204, [#allocation7]
        $region20: #{latent_attention_block.1} parent=11 // pred_fallthru
          _
        // Predicated region
        $region21: #{latent_attention_block.1} parent=11 // pred_check
          %p207 = pneg %p110
        $region22: #{latent_attention_block.1} parent=11 // pred_check_branch
          %209 = sbr.rel (%p207) target = $region24
        $region23: #{latent_attention_block.1} parent=11 // pred_region
          %s211 = ssub.s32 2048, 2048
          %212 = vsyncadd [#allocation7], %s211
          %s213 = sshll.u32 [#allocation8], 4
          %s214 = int_to_ptr.vmem [resolvable:$true] %s213
          %219 = dma.hbm_to_vmem [thread:$0]  %s3, 2048, %s214, [#allocation7], 256, 256, 16
        $region24: #{latent_attention_block.1} parent=11 // pred_fallthru
          _
        // Predicated region
        $region25: #{latent_attention_block.1} parent=11 // pred_check
          %p220 = pneg %p131
        $region26: #{latent_attention_block.1} parent=11 // pred_check_branch
          %222 = sbr.rel (%p220) target = $region28
        $region27: #{latent_attention_block.1} parent=11 // pred_region
          %s224 = ssub.s32 512, 512
          %225 = vsyncadd [#allocation10], %s224
          %s226 = sshll.u32 [#allocation9], 4
          %s227 = int_to_ptr.vmem [resolvable:$true] %s226
          %232 = dma.hbm_to_vmem [thread:$0]  %s4, 512, %s227, [#allocation10], 64, 64, 4
        $region28: #{latent_attention_block.1} parent=11 // pred_fallthru
          _
        // Predicated region
        $region29: #{latent_attention_block.1} parent=11 // pred_check
          %p233 = pneg %p152
        $region30: #{latent_attention_block.1} parent=11 // pred_check_branch
          %235 = sbr.rel (%p233) target = $region32
        $region31: #{latent_attention_block.1} parent=11 // pred_region
          %s237 = ssub.s32 512, 512
          %238 = vsyncadd [#allocation10], %s237
          %s239 = sshll.u32 [#allocation11], 4
          %s240 = int_to_ptr.vmem [resolvable:$true] %s239
          %245 = dma.hbm_to_vmem [thread:$0]  %s5, 512, %s240, [#allocation10], 64, 64, 4
        $region32: #{latent_attention_block.1} parent=11 // pred_fallthru
          _
      $region12: #{latent_attention_block.1} parent=5 // pred_fallthru
        _
      %p246 = scmp.lt.s32.totalorder %s21, 2
      // Predicated region
      $region33: #{latent_attention_block.1} parent=5 // pred_check
        %p247 = pneg %p246
      $region34: #{latent_attention_block.1} parent=5 // pred_check_branch
        %249 = sbr.rel (%p247) target = $region36
      $region35: #{latent_attention_block.1} parent=5 // pred_region
        // Predicated region
        $region37: #{latent_attention_block.1} parent=35 // pred_check
          %p250 = pneg %p62
        $region38: #{latent_attention_block.1} parent=35 // pred_check_branch
          %252 = sbr.rel (%p250) target = $region40
        $region39: #{latent_attention_block.1} parent=35 // pred_region
          %s253 = sand.u32 %s52, 1
          %s254 = scalar_lea.sflag [#allocation4], %s253
          %s255 = sand.u32 %s52, 1
          %s256 = smul.addr %s255, 128
          %s257 = scalar_lea.vmem [#allocation3], %s256
          %s259 = ssub.s32 2048, 2048
          %260 = vsyncadd %s254, %s259
          %s261 = smul.addr %s21, 16
          %s262 = smul.addr %s261, 128
          %s263 = scalar_lea.hbm %s1, %s262
          %s264 = sshll.u32 %s257, 4
          %s265 = int_to_ptr.vmem [resolvable:$true] %s264
          %270 = dma.hbm_to_vmem [thread:$0]  %s263, 2048, %s265, %s254, 128, 128, 8
        $region40: #{latent_attention_block.1} parent=35 // pred_fallthru
          _
      $region36: #{latent_attention_block.1} parent=5 // pred_fallthru
        _
      %p271 = scmp.le.s32.totalorder 1, %s21
      %p272 = scmp.lt.s32.totalorder %s21, 3
      %p273 = pnand %p271, %p272
      %p274 = pneg %p273
      // Predicated region
      $region41: #{latent_attention_block.1} parent=5 // pred_check
        _
      $region42: #{latent_attention_block.1} parent=5 // pred_check_branch
        %276 = sbr.rel (%p273) target = $region44
      $region43: #{latent_attention_block.1} parent=5 // pred_region
        %s277 = ssub.s32 %s21, 1
        %s278 = sand.u32 %s55, 1
        %s279 = scalar_lea.sflag [#allocation4], %s278
        %s280 = sand.u32 %s55, 1
        %s281 = smul.addr %s280, 128
        %s282 = scalar_lea.vmem [#allocation3], %s281
        // Predicated region
        $region45: #{latent_attention_block.1} parent=43 // pred_check
          %p283 = pneg %p68
        $region46: #{latent_attention_block.1} parent=43 // pred_check_branch
          %285 = sbr.rel (%p283) target = $region48
        $region47: #{latent_attention_block.1} parent=43 // pred_region
          %286 = dma.done %s279, 2048
        $region48: #{latent_attention_block.1} parent=43 // pred_fallthru
          _
        // Predicated region
        $region49: #{latent_attention_block.1} parent=43 // pred_check
          %p287 = pneg %p89
        $region50: #{latent_attention_block.1} parent=43 // pred_check_branch
          %289 = sbr.rel (%p287) target = $region52
        $region51: #{latent_attention_block.1} parent=43 // pred_region
          %290 = dma.done [#allocation7], 16
        $region52: #{latent_attention_block.1} parent=43 // pred_fallthru
          _
        // Predicated region
        $region53: #{latent_attention_block.1} parent=43 // pred_check
          %p291 = pneg %p110
        $region54: #{latent_attention_block.1} parent=43 // pred_check_branch
          %293 = sbr.rel (%p291) target = $region56
        $region55: #{latent_attention_block.1} parent=43 // pred_region
          %294 = dma.done [#allocation7], 2048
        $region56: #{latent_attention_block.1} parent=43 // pred_fallthru
          _
        // Predicated region
        $region57: #{latent_attention_block.1} parent=43 // pred_check
          %p295 = pneg %p131
        $region58: #{latent_attention_block.1} parent=43 // pred_check_branch
          %297 = sbr.rel (%p295) target = $region60
        $region59: #{latent_attention_block.1} parent=43 // pred_region
          %298 = dma.done [#allocation10], 512
        $region60: #{latent_attention_block.1} parent=43 // pred_fallthru
          _
        // Predicated region
        $region61: #{latent_attention_block.1} parent=43 // pred_check
          %p299 = pneg %p152
        $region62: #{latent_attention_block.1} parent=43 // pred_check_branch
          %301 = sbr.rel (%p299) target = $region64
        $region63: #{latent_attention_block.1} parent=43 // pred_region
          %302 = dma.done [#allocation10], 512
        $region64: #{latent_attention_block.1} parent=43 // pred_fallthru
          _
        %p303 = pneg %p42
        %p304 = pneg %p39
        %s305 = sand.u32 %s55, 1
        %s306 = scalar_lea.sflag [#allocation4], %s305
        %s307 = sand.u32 %s55, 1
        %s308 = smul.addr %s307, 128
        %s309 = scalar_lea.vmem [#allocation3], %s308
        %p310 = pneg %p68
        %p311 = pneg %p65
        %p312 = pneg %p89
        %p313 = pneg %p86
        %p314 = pneg %p110
        %p315 = pneg %p107
        %p316 = pneg %p131
        %p317 = pneg %p128
        %p318 = pneg %p152
        %p319 = pneg %p149
        %p320 = pneg %p178
        %p321 = pneg %p175
        %s322 = sand.u32 %s165, 1
        %s323 = scalar_lea.sflag [#allocation5], %s322
        %s324 = sand.u32 %s165, 1
        %s325 = smul.addr %s324, 8
        %s326 = scalar_lea.vmem [#allocation12], %s325
        %v328 = vld [vmem:[%s282] sm:$0xff]
        %v329 = vld [vmem:[%s282 + $0x8] sm:$0xff]
        %v330 = vld [vmem:[%s282 + $0x10] sm:$0xff]
        %v331 = vld [vmem:[%s282 + $0x18] sm:$0xff]
        %v332 = vld [vmem:[%s282 + $0x20] sm:$0xff]
        %v333 = vld [vmem:[%s282 + $0x28] sm:$0xff]
        %v334 = vld [vmem:[%s282 + $0x30] sm:$0xff]
        %v335 = vld [vmem:[%s282 + $0x38] sm:$0xff]
        %v336 = vld [vmem:[%s282 + $0x40] sm:$0xff]
        %v337 = vld [vmem:[%s282 + $0x48] sm:$0xff]
        %v338 = vld [vmem:[%s282 + $0x50] sm:$0xff]
        %v339 = vld [vmem:[%s282 + $0x58] sm:$0xff]
        %v340 = vld [vmem:[%s282 + $0x60] sm:$0xff]
        %v341 = vld [vmem:[%s282 + $0x68] sm:$0xff]
        %v342 = vld [vmem:[%s282 + $0x70] sm:$0xff]
        %v343 = vld [vmem:[%s282 + $0x78] sm:$0xff]
        %vm344 = vcmask 523264
        %v345 = vsel %vm344, %v328, 0.0
        %346 = vadd.xlane.f32.xlu0 %v345
        %v347 = vpop.xlane.xlu0 %346
        %v348 = vsel %vm344, %v329, 0.0
        %349 = vadd.xlane.f32.xlu0 %v348
        %v350 = vpop.xlane.xlu0 %349
        %v351 = vsel %vm344, %v330, 0.0
        %352 = vadd.xlane.f32.xlu0 %v351
        %v353 = vpop.xlane.xlu0 %352
        %v354 = vsel %vm344, %v331, 0.0
        %355 = vadd.xlane.f32.xlu0 %v354
        %v356 = vpop.xlane.xlu0 %355
        %v357 = vsel %vm344, %v332, 0.0
        %358 = vadd.xlane.f32.xlu0 %v357
        %v359 = vpop.xlane.xlu0 %358
        %v360 = vsel %vm344, %v333, 0.0
        %361 = vadd.xlane.f32.xlu0 %v360
        %v362 = vpop.xlane.xlu0 %361
        %v363 = vsel %vm344, %v334, 0.0
        %364 = vadd.xlane.f32.xlu0 %v363
        %v365 = vpop.xlane.xlu0 %364
        %v366 = vsel %vm344, %v335, 0.0
        %367 = vadd.xlane.f32.xlu0 %v366
        %v368 = vpop.xlane.xlu0 %367
        %v369 = vsel %vm344, %v336, 0.0
        %370 = vadd.xlane.f32.xlu0 %v369
        %v371 = vpop.xlane.xlu0 %370
        %v372 = vsel %vm344, %v337, 0.0
        %373 = vadd.xlane.f32.xlu0 %v372
        %v374 = vpop.xlane.xlu0 %373
        %v375 = vsel %vm344, %v338, 0.0
        %376 = vadd.xlane.f32.xlu0 %v375
        %v377 = vpop.xlane.xlu0 %376
        %v378 = vsel %vm344, %v339, 0.0
        %379 = vadd.xlane.f32.xlu0 %v378
        %v380 = vpop.xlane.xlu0 %379
        %v381 = vsel %vm344, %v340, 0.0
        %382 = vadd.xlane.f32.xlu0 %v381
        %v383 = vpop.xlane.xlu0 %382
        %v384 = vsel %vm344, %v341, 0.0
        %385 = vadd.xlane.f32.xlu0 %v384
        %v386 = vpop.xlane.xlu0 %385
        %v387 = vsel %vm344, %v342, 0.0
        %388 = vadd.xlane.f32.xlu0 %v387
        %v389 = vpop.xlane.xlu0 %388
        %v390 = vsel %vm344, %v343, 0.0
        %391 = vadd.xlane.f32.xlu0 %v390
        %v392 = vpop.xlane.xlu0 %391
        %v393 = vrcp.pop 64.0
        %v394 = vmul.f32 %v347, %v393
        %v395 = vmul.f32 %v350, %v393
        %v396 = vmul.f32 %v353, %v393
        %v397 = vmul.f32 %v356, %v393
        %v398 = vmul.f32 %v359, %v393
        %v399 = vmul.f32 %v362, %v393
        %v400 = vmul.f32 %v365, %v393
        %v401 = vmul.f32 %v368, %v393
        %v402 = vmul.f32 %v371, %v393
        %v403 = vmul.f32 %v374, %v393
        %v404 = vmul.f32 %v377, %v393
        %v405 = vmul.f32 %v380, %v393
        %v406 = vmul.f32 %v383, %v393
        %v407 = vmul.f32 %v386, %v393
        %v408 = vmul.f32 %v389, %v393
        %v409 = vmul.f32 %v392, %v393
        %v410 = vsub.f32 %v328, %v394
        %v411 = vsub.f32 %v329, %v395
        %v412 = vsub.f32 %v330, %v396
        %v413 = vsub.f32 %v331, %v397
        %v414 = vsub.f32 %v332, %v398
        %v415 = vsub.f32 %v333, %v399
        %v416 = vsub.f32 %v334, %v400
        %v417 = vsub.f32 %v335, %v401
        %v418 = vsub.f32 %v336, %v402
        %v419 = vsub.f32 %v337, %v403
        %v420 = vsub.f32 %v338, %v404
        %v421 = vsub.f32 %v339, %v405
        %v422 = vsub.f32 %v340, %v406
        %v423 = vsub.f32 %v341, %v407
        %v424 = vsub.f32 %v342, %v408
        %v425 = vsub.f32 %v343, %v409
        %v426 = vmul.f32 %v410, %v410
        %v427 = vmul.f32 %v411, %v411
        %v428 = vmul.f32 %v412, %v412
        %v429 = vmul.f32 %v413, %v413
        %v430 = vmul.f32 %v414, %v414
        %v431 = vmul.f32 %v415, %v415
        %v432 = vmul.f32 %v416, %v416
        %v433 = vmul.f32 %v417, %v417
        %v434 = vmul.f32 %v418, %v418
        %v435 = vmul.f32 %v419, %v419
        %v436 = vmul.f32 %v420, %v420
        %v437 = vmul.f32 %v421, %v421
        %v438 = vmul.f32 %v422, %v422
        %v439 = vmul.f32 %v423, %v423
        %v440 = vmul.f32 %v424, %v424
        %v441 = vmul.f32 %v425, %v425
        %v442 = vsel %vm344, %v426, 0.0
        %443 = vadd.xlane.f32.xlu0 %v442
        %v444 = vpop.xlane.xlu0 %443
        %v445 = vsel %vm344, %v427, 0.0
        %446 = vadd.xlane.f32.xlu0 %v445
        %v447 = vpop.xlane.xlu0 %446
        %v448 = vsel %vm344, %v428, 0.0
        %449 = vadd.xlane.f32.xlu0 %v448
        %v450 = vpop.xlane.xlu0 %449
        %v451 = vsel %vm344, %v429, 0.0
        %452 = vadd.xlane.f32.xlu0 %v451
        %v453 = vpop.xlane.xlu0 %452
        %v454 = vsel %vm344, %v430, 0.0
        %455 = vadd.xlane.f32.xlu0 %v454
        %v456 = vpop.xlane.xlu0 %455
        %v457 = vsel %vm344, %v431, 0.0
        %458 = vadd.xlane.f32.xlu0 %v457
        %v459 = vpop.xlane.xlu0 %458
        %v460 = vsel %vm344, %v432, 0.0
        %461 = vadd.xlane.f32.xlu0 %v460
        %v462 = vpop.xlane.xlu0 %461
        %v463 = vsel %vm344, %v433, 0.0
        %464 = vadd.xlane.f32.xlu0 %v463
        %v465 = vpop.xlane.xlu0 %464
        %v466 = vsel %vm344, %v434, 0.0
        %467 = vadd.xlane.f32.xlu0 %v466
        %v468 = vpop.xlane.xlu0 %467
        %v469 = vsel %vm344, %v435, 0.0
        %470 = vadd.xlane.f32.xlu0 %v469
        %v471 = vpop.xlane.xlu0 %470
        %v472 = vsel %vm344, %v436, 0.0
        %473 = vadd.xlane.f32.xlu0 %v472
        %v474 = vpop.xlane.xlu0 %473
        %v475 = vsel %vm344, %v437, 0.0
        %476 = vadd.xlane.f32.xlu0 %v475
        %v477 = vpop.xlane.xlu0 %476
        %v478 = vsel %vm344, %v438, 0.0
        %479 = vadd.xlane.f32.xlu0 %v478
        %v480 = vpop.xlane.xlu0 %479
        %v481 = vsel %vm344, %v439, 0.0
        %482 = vadd.xlane.f32.xlu0 %v481
        %v483 = vpop.xlane.xlu0 %482
        %v484 = vsel %vm344, %v440, 0.0
        %485 = vadd.xlane.f32.xlu0 %v484
        %v486 = vpop.xlane.xlu0 %485
        %v487 = vsel %vm344, %v441, 0.0
        %488 = vadd.xlane.f32.xlu0 %v487
        %v489 = vpop.xlane.xlu0 %488
        %v490 = vmul.f32 %v444, %v393
        %v491 = vmul.f32 %v447, %v393
        %v492 = vmul.f32 %v450, %v393
        %v493 = vmul.f32 %v453, %v393
        %v494 = vmul.f32 %v456, %v393
        %v495 = vmul.f32 %v459, %v393
        %v496 = vmul.f32 %v462, %v393
        %v497 = vmul.f32 %v465, %v393
        %v498 = vmul.f32 %v468, %v393
        %v499 = vmul.f32 %v471, %v393
        %v500 = vmul.f32 %v474, %v393
        %v501 = vmul.f32 %v477, %v393
        %v502 = vmul.f32 %v480, %v393
        %v503 = vmul.f32 %v483, %v393
        %v504 = vmul.f32 %v486, %v393
        %v505 = vmul.f32 %v489, %v393
        %v506 = vadd.f32 %v490, 1e-05
        %v507 = vadd.f32 %v491, 1e-05
        %v508 = vadd.f32 %v492, 1e-05
        %v509 = vadd.f32 %v493, 1e-05
        %v510 = vadd.f32 %v494, 1e-05
        %v511 = vadd.f32 %v495, 1e-05
        %v512 = vadd.f32 %v496, 1e-05
        %v513 = vadd.f32 %v497, 1e-05
        %v514 = vadd.f32 %v498, 1e-05
        %v515 = vadd.f32 %v499, 1e-05
        %v516 = vadd.f32 %v500, 1e-05
        %v517 = vadd.f32 %v501, 1e-05
        %v518 = vadd.f32 %v502, 1e-05
        %v519 = vadd.f32 %v503, 1e-05
        %v520 = vadd.f32 %v504, 1e-05
        %v521 = vadd.f32 %v505, 1e-05
        %v522 = vrsqrt.pop %v506
        %v523 = vrsqrt.pop %v507
        %v524 = vrsqrt.pop %v508
        %v525 = vrsqrt.pop %v509
        %v526 = vrsqrt.pop %v510
        %v527 = vrsqrt.pop %v511
        %v528 = vrsqrt.pop %v512
        %v529 = vrsqrt.pop %v513
        %v530 = vrsqrt.pop %v514
        %v531 = vrsqrt.pop %v515
        %v532 = vrsqrt.pop %v516
        %v533 = vrsqrt.pop %v517
        %v534 = vrsqrt.pop %v518
        %v535 = vrsqrt.pop %v519
        %v536 = vrsqrt.pop %v520
        %v537 = vrsqrt.pop %v521
        %v538 = vmul.f32 %v410, %v522
        %v539 = vmul.f32 %v411, %v523
        %v540 = vmul.f32 %v412, %v524
        %v541 = vmul.f32 %v413, %v525
        %v542 = vmul.f32 %v414, %v526
        %v543 = vmul.f32 %v415, %v527
        %v544 = vmul.f32 %v416, %v528
        %v545 = vmul.f32 %v417, %v529
        %v546 = vmul.f32 %v418, %v530
        %v547 = vmul.f32 %v419, %v531
        %v548 = vmul.f32 %v420, %v532
        %v549 = vmul.f32 %v421, %v533
        %v550 = vmul.f32 %v422, %v534
        %v551 = vmul.f32 %v423, %v535
        %v552 = vmul.f32 %v424, %v536
        %v553 = vmul.f32 %v425, %v537
        %v554 = vld [vmem:[#allocation6] sm:$0x1]
        %v556 = vlaneseq
        %v557 = vshrl.u32 %v556, 7
        %v558 = vsub.s32 0, %v557
        %v559 = vrot.slane %v554, %v558
        %v561 = vmul.f32 %v538, %v559
        %v562 = vmul.f32 %v539, %v559
        %v563 = vmul.f32 %v540, %v559
        %v564 = vmul.f32 %v541, %v559
        %v565 = vmul.f32 %v542, %v559
        %v566 = vmul.f32 %v543, %v559
        %v567 = vmul.f32 %v544, %v559
        %v568 = vmul.f32 %v545, %v559
        %v569 = vmul.f32 %v546, %v559
        %v570 = vmul.f32 %v547, %v559
        %v571 = vmul.f32 %v548, %v559
        %v572 = vmul.f32 %v549, %v559
        %v573 = vmul.f32 %v550, %v559
        %v574 = vmul.f32 %v551, %v559
        %v575 = vmul.f32 %v552, %v559
        %v576 = vmul.f32 %v553, %v559
        %v577 = vpack.c.bf16 %v562, %v561
        %v578 = vpack.c.bf16 %v564, %v563
        %v579 = vpack.c.bf16 %v566, %v565
        %v580 = vpack.c.bf16 %v568, %v567
        %v581 = vpack.c.bf16 %v570, %v569
        %v582 = vpack.c.bf16 %v572, %v571
        %v583 = vpack.c.bf16 %v574, %v573
        %v584 = vpack.c.bf16 %v576, %v575
        %v585 = vld [vmem:[#allocation8] sm:$0xff]
        %v586 = vld [vmem:[#allocation8 + $0x8] sm:$0xff]
        %v587 = vld [vmem:[#allocation8 + $0x10] sm:$0xff]
        %v588 = vld [vmem:[#allocation8 + $0x18] sm:$0xff]
        %v589 = vld [vmem:[#allocation8 + $0x20] sm:$0xff]
        %v590 = vld [vmem:[#allocation8 + $0x28] sm:$0xff]
        %v591 = vld [vmem:[#allocation8 + $0x30] sm:$0xff]
        %v592 = vld [vmem:[#allocation8 + $0x38] sm:$0xff]
        %v593 = vld [vmem:[#allocation8 + $0x40] sm:$0xff]
        %v594 = vld [vmem:[#allocation8 + $0x48] sm:$0xff]
        %v595 = vld [vmem:[#allocation8 + $0x50] sm:$0xff]
        %v596 = vld [vmem:[#allocation8 + $0x58] sm:$0xff]
        %v597 = vld [vmem:[#allocation8 + $0x60] sm:$0xff]
        %v598 = vld [vmem:[#allocation8 + $0x68] sm:$0xff]
        %v599 = vld [vmem:[#allocation8 + $0x70] sm:$0xff]
        %v600 = vld [vmem:[#allocation8 + $0x78] sm:$0xff]
        %v617 = vunpack.c.l.b16 %v585
        %v618 = vunpack.c.h.b16 %v585
        %v619 = vunpack.c.l.b16 %v586
        %v620 = vunpack.c.h.b16 %v586
        %v621 = vunpack.c.l.b16 %v587
        %v622 = vunpack.c.h.b16 %v587
        %v623 = vunpack.c.l.b16 %v588
        %v624 = vunpack.c.h.b16 %v588
        %v625 = vunpack.c.l.b16 %v589
        %v626 = vunpack.c.h.b16 %v589
        %v627 = vunpack.c.l.b16 %v590
        %v628 = vunpack.c.h.b16 %v590
        %v629 = vunpack.c.l.b16 %v591
        %v630 = vunpack.c.h.b16 %v591
        %v631 = vunpack.c.l.b16 %v592
        %v632 = vunpack.c.h.b16 %v592
        %v633 = vunpack.c.l.b16 %v593
        %v634 = vunpack.c.h.b16 %v593
        %v635 = vunpack.c.l.b16 %v594
        %v636 = vunpack.c.h.b16 %v594
        %v637 = vunpack.c.l.b16 %v595
        %v638 = vunpack.c.h.b16 %v595
        %v639 = vunpack.c.l.b16 %v596
        %v640 = vunpack.c.h.b16 %v596
        %v641 = vunpack.c.l.b16 %v597
        %v642 = vunpack.c.h.b16 %v597
        %v643 = vunpack.c.l.b16 %v598
        %v644 = vunpack.c.h.b16 %v598
        %v645 = vunpack.c.l.b16 %v599
        %v646 = vunpack.c.h.b16 %v599
        %v647 = vunpack.c.l.b16 %v600
        %v648 = vunpack.c.h.b16 %v600
        %v649 = vpack.c.b16 %v621, %v617
        %v650 = vpack.c.b16 %v622, %v618
        %v651 = vpack.c.b16 %v623, %v619
        %v652 = vpack.c.b16 %v624, %v620
        %v653 = vpack.c.b16 %v629, %v625
        %v654 = vpack.c.b16 %v630, %v626
        %v655 = vpack.c.b16 %v631, %v627
        %v656 = vpack.c.b16 %v632, %v628
        %v657 = vpack.c.b16 %v637, %v633
        %v658 = vpack.c.b16 %v638, %v634
        %v659 = vpack.c.b16 %v639, %v635
        %v660 = vpack.c.b16 %v640, %v636
        %v661 = vpack.c.b16 %v645, %v641
        %v662 = vpack.c.b16 %v646, %v642
        %v663 = vpack.c.b16 %v647, %v643
        %v664 = vpack.c.b16 %v648, %v644
        %v682 = vsel %vm344, %v577, 0
        %v685 = vsel %vm344, %v578, 0
        %v688 = vsel %vm344, %v579, 0
        %v691 = vsel %vm344, %v580, 0
        %v694 = vsel %vm344, %v581, 0
        %v697 = vsel %vm344, %v582, 0
        %v700 = vsel %vm344, %v583, 0
        %v703 = vsel %vm344, %v584, 0
        %705 = vmatprep.subr.bf16.mxu0 %v650
        %706 = vmatpush1.bf16.msra.mxu0 %v649
        %707 = vmatprep.subr.bf16.mxu0 %v654
        %708 = vmatpush1.bf16.msra.mxu0 %v653
        %709 = vmatprep.subr.bf16.mxu0 %v658
        %710 = vmatpush1.bf16.msra.mxu0 %v657
        %711 = vmatprep.subr.bf16.mxu0 %v662
        %712 = vmatpush1.bf16.msra.mxu0 %v661
        %713 = vmatprep.subr.bf16.mxu0 0
        %714 = vmatpush1.bf16.msra.mxu0 0
        %715 = vmatprep.subr.bf16.mxu0 0
        %716 = vmatpush1.bf16.msra.mxu0 0
        %717 = vmatprep.subr.bf16.mxu0 0
        %718 = vmatpush1.bf16.msra.mxu0 0
        %719 = vmatprep.subr.bf16.mxu0 0
        %720 = vmatpush1.bf16.msra.mxu0 0
        %721 = vmatprep.subr.bf16.mxu0 0
        %722 = vmatpush1.bf16.msra.mxu0 0
        %723 = vmatprep.subr.bf16.mxu0 0
        %724 = vmatpush1.bf16.msra.mxu0 0
        %725 = vmatprep.subr.bf16.mxu0 0
        %726 = vmatpush1.bf16.msra.mxu0 0
        %727 = vmatprep.subr.bf16.mxu0 0
        %728 = vmatpush1.bf16.msra.mxu0 0
        %729 = vmatprep.subr.bf16.mxu0 0
        %730 = vmatpush1.bf16.msra.mxu0 0
        %731 = vmatprep.subr.bf16.mxu0 0
        %732 = vmatpush1.bf16.msra.mxu0 0
        %733 = vmatprep.subr.bf16.mxu0 0
        %734 = vmatpush1.bf16.msra.mxu0 0
        %735 = vmatprep.subr.bf16.mxu0 0
        %736 = vmatpush1.bf16.msra.mxu0 0
        %737 = vmatprep.mubr.bf16.mxu0 0
        %738 = vmatmul.mubr.bf16.gmra.mrb[0].mxu0 %v682
        %v739 = vpop.f32.mrb[0].mxu0
        %v740 = vadd.f32 0.0, %v739
        %v741 = vpop.f32.mrb[0].mxu0
        %v742 = vadd.f32 0.0, %v741
        %v743 = vpop.f32.mrb[0].mxu0
        %v744 = vadd.f32 0.0, %v743
        %v745 = vpop.f32.mrb[0].mxu0
        %v746 = vadd.f32 0.0, %v745
        %747 = vmatprep.mubr.bf16.mxu0 0
        %748 = vmatmul.mubr.bf16.gmra.mrb[0].mxu0 %v685
        %v749 = vpop.f32.mrb[0].mxu0
        %v750 = vadd.f32 0.0, %v749
        %v751 = vpop.f32.mrb[0].mxu0
        %v752 = vadd.f32 0.0, %v751
        %v753 = vpop.f32.mrb[0].mxu0
        %v754 = vadd.f32 0.0, %v753
        %v755 = vpop.f32.mrb[0].mxu0
        %v756 = vadd.f32 0.0, %v755
        %757 = vmatprep.mubr.bf16.mxu0 0
        %758 = vmatmul.mubr.bf16.gmra.mrb[0].mxu0 %v688
        %v759 = vpop.f32.mrb[0].mxu0
        %v760 = vadd.f32 0.0, %v759
        %v761 = vpop.f32.mrb[0].mxu0
        %v762 = vadd.f32 0.0, %v761
        %v763 = vpop.f32.mrb[0].mxu0
        %v764 = vadd.f32 0.0, %v763
        %v765 = vpop.f32.mrb[0].mxu0
        %v766 = vadd.f32 0.0, %v765
        %767 = vmatprep.mubr.bf16.mxu0 0
        %768 = vmatmul.mubr.bf16.gmra.mrb[0].mxu0 %v691
        %v769 = vpop.f32.mrb[0].mxu0
        %v770 = vadd.f32 0.0, %v769
        %v771 = vpop.f32.mrb[0].mxu0
        %v772 = vadd.f32 0.0, %v771
        %v773 = vpop.f32.mrb[0].mxu0
        %v774 = vadd.f32 0.0, %v773
        %v775 = vpop.f32.mrb[0].mxu0
        %v776 = vadd.f32 0.0, %v775
        %777 = vmatprep.mubr.bf16.mxu0 0
        %778 = vmatmul.mubr.bf16.gmra.mrb[0].mxu0 %v694
        %v779 = vpop.f32.mrb[0].mxu0
        %v780 = vadd.f32 0.0, %v779
        %v781 = vpop.f32.mrb[0].mxu0
        %v782 = vadd.f32 0.0, %v781
        %v783 = vpop.f32.mrb[0].mxu0
        %v784 = vadd.f32 0.0, %v783
        %v785 = vpop.f32.mrb[0].mxu0
        %v786 = vadd.f32 0.0, %v785
        %787 = vmatprep.mubr.bf16.mxu0 0
        %788 = vmatmul.mubr.bf16.gmra.mrb[0].mxu0 %v697
        %v789 = vpop.f32.mrb[0].mxu0
        %v790 = vadd.f32 0.0, %v789
        %v791 = vpop.f32.mrb[0].mxu0
        %v792 = vadd.f32 0.0, %v791
        %v793 = vpop.f32.mrb[0].mxu0
        %v794 = vadd.f32 0.0, %v793
        %v795 = vpop.f32.mrb[0].mxu0
        %v796 = vadd.f32 0.0, %v795
        %797 = vmatprep.mubr.bf16.mxu0 0
        %798 = vmatmul.mubr.bf16.gmra.mrb[0].mxu0 %v700
        %v799 = vpop.f32.mrb[0].mxu0
        %v800 = vadd.f32 0.0, %v799
        %v801 = vpop.f32.mrb[0].mxu0
        %v802 = vadd.f32 0.0, %v801
        %v803 = vpop.f32.mrb[0].mxu0
        %v804 = vadd.f32 0.0, %v803
        %v805 = vpop.f32.mrb[0].mxu0
        %v806 = vadd.f32 0.0, %v805
        %807 = vmatprep.mubr.bf16.mxu0 0
        %808 = vmatmul.mubr.bf16.gmra.mrb[0].mxu0 %v703
        %v809 = vpop.f32.mrb[0].mxu0
        %v810 = vadd.f32 0.0, %v809
        %v811 = vpop.f32.mrb[0].mxu0
        %v812 = vadd.f32 0.0, %v811
        %v813 = vpop.f32.mrb[0].mxu0
        %v814 = vadd.f32 0.0, %v813
        %v815 = vpop.f32.mrb[0].mxu0
        %v816 = vadd.f32 0.0, %v815
        %817 = vdwg.mxu0
        %818 = vmatprep.subr.bf16.mxu0 %v652
        %819 = vmatpush1.bf16.msra.mxu0 %v651
        %820 = vmatprep.subr.bf16.mxu0 %v656
        %821 = vmatpush1.bf16.msra.mxu0 %v655
        %822 = vmatprep.subr.bf16.mxu0 %v660
        %823 = vmatpush1.bf16.msra.mxu0 %v659
        %824 = vmatprep.subr.bf16.mxu0 %v664
        %825 = vmatpush1.bf16.msra.mxu0 %v663
        %826 = vmatprep.subr.bf16.mxu0 0
        %827 = vmatpush1.bf16.msra.mxu0 0
        %828 = vmatprep.subr.bf16.mxu0 0
        %829 = vmatpush1.bf16.msra.mxu0 0
        %830 = vmatprep.subr.bf16.mxu0 0
        %831 = vmatpush1.bf16.msra.mxu0 0
        %832 = vmatprep.subr.bf16.mxu0 0
        %833 = vmatpush1.bf16.msra.mxu0 0
        %834 = vmatprep.subr.bf16.mxu0 0
        %835 = vmatpush1.bf16.msra.mxu0 0
        %836 = vmatprep.subr.bf16.mxu0 0
        %837 = vmatpush1.bf16.msra.mxu0 0
        %838 = vmatprep.subr.bf16.mxu0 0
        %839 = vmatpush1.bf16.msra.mxu0 0
        %840 = vmatprep.subr.bf16.mxu0 0
        %841 = vmatpush1.bf16.msra.mxu0 0
        %842 = vmatprep.subr.bf16.mxu0 0
        %843 = vmatpush1.bf16.msra.mxu0 0
        %844 = vmatprep.subr.bf16.mxu0 0
        %845 = vmatpush1.bf16.msra.mxu0 0
        %846 = vmatprep.subr.bf16.mxu0 0
        %847 = vmatpush1.bf16.msra.mxu0 0
        %848 = vmatprep.subr.bf16.mxu0 0
        %849 = vmatpush1.bf16.msra.mxu0 0
        %850 = vmatprep.mubr.bf16.mxu0 0
        %851 = vmatmul.mubr.bf16.gmra.mrb[0].mxu0 %v682
        %v852 = vpop.f32.mrb[0].mxu0
        %v853 = vadd.f32 0.0, %v852
        %v854 = vpop.f32.mrb[0].mxu0
        %v855 = vadd.f32 0.0, %v854
        %v856 = vpop.f32.mrb[0].mxu0
        %v857 = vadd.f32 0.0, %v856
        %v858 = vpop.f32.mrb[0].mxu0
        %v859 = vadd.f32 0.0, %v858
        %860 = vmatprep.mubr.bf16.mxu0 0
        %861 = vmatmul.mubr.bf16.gmra.mrb[0].mxu0 %v685
        %v862 = vpop.f32.mrb[0].mxu0
        %v863 = vadd.f32 0.0, %v862
        %v864 = vpop.f32.mrb[0].mxu0
        %v865 = vadd.f32 0.0, %v864
        %v866 = vpop.f32.mrb[0].mxu0
        %v867 = vadd.f32 0.0, %v866
        %v868 = vpop.f32.mrb[0].mxu0
        %v869 = vadd.f32 0.0, %v868
        %870 = vmatprep.mubr.bf16.mxu0 0
        %871 = vmatmul.mubr.bf16.gmra.mrb[0].mxu0 %v688
        %v872 = vpop.f32.mrb[0].mxu0
        %v873 = vadd.f32 0.0, %v872
        %v874 = vpop.f32.mrb[0].mxu0
        %v875 = vadd.f32 0.0, %v874
        %v876 = vpop.f32.mrb[0].mxu0
        %v877 = vadd.f32 0.0, %v876
        %v878 = vpop.f32.mrb[0].mxu0
        %v879 = vadd.f32 0.0, %v878
        %880 = vmatprep.mubr.bf16.mxu0 0
        %881 = vmatmul.mubr.bf16.gmra.mrb[0].mxu0 %v691
        %v882 = vpop.f32.mrb[0].mxu0
        %v883 = vadd.f32 0.0, %v882
        %v884 = vpop.f32.mrb[0].mxu0
        %v885 = vadd.f32 0.0, %v884
        %v886 = vpop.f32.mrb[0].mxu0
        %v887 = vadd.f32 0.0, %v886
        %v888 = vpop.f32.mrb[0].mxu0
        %v889 = vadd.f32 0.0, %v888
        %890 = vmatprep.mubr.bf16.mxu0 0
        %891 = vmatmul.mubr.bf16.gmra.mrb[0].mxu0 %v694
        %v892 = vpop.f32.mrb[0].mxu0
        %v893 = vadd.f32 0.0, %v892
        %v894 = vpop.f32.mrb[0].mxu0
        %v895 = vadd.f32 0.0, %v894
        %v896 = vpop.f32.mrb[0].mxu0
        %v897 = vadd.f32 0.0, %v896
        %v898 = vpop.f32.mrb[0].mxu0
        %v899 = vadd.f32 0.0, %v898
        %900 = vmatprep.mubr.bf16.mxu0 0
        %901 = vmatmul.mubr.bf16.gmra.mrb[0].mxu0 %v697
        %v902 = vpop.f32.mrb[0].mxu0
        %v903 = vadd.f32 0.0, %v902
        %v904 = vpop.f32.mrb[0].mxu0
        %v905 = vadd.f32 0.0, %v904
        %v906 = vpop.f32.mrb[0].mxu0
        %v907 = vadd.f32 0.0, %v906
        %v908 = vpop.f32.mrb[0].mxu0
        %v909 = vadd.f32 0.0, %v908
        %910 = vmatprep.mubr.bf16.mxu0 0
        %911 = vmatmul.mubr.bf16.gmra.mrb[0].mxu0 %v700
        %v912 = vpop.f32.mrb[0].mxu0
        %v913 = vadd.f32 0.0, %v912
        %v914 = vpop.f32.mrb[0].mxu0
        %v915 = vadd.f32 0.0, %v914
        %v916 = vpop.f32.mrb[0].mxu0
        %v917 = vadd.f32 0.0, %v916
        %v918 = vpop.f32.mrb[0].mxu0
        %v919 = vadd.f32 0.0, %v918
        %920 = vmatprep.mubr.bf16.mxu0 0
        %921 = vmatmul.mubr.bf16.gmra.mrb[0].mxu0 %v703
        %v922 = vpop.f32.mrb[0].mxu0
        %v923 = vadd.f32 0.0, %v922
        %v924 = vpop.f32.mrb[0].mxu0
        %v925 = vadd.f32 0.0, %v924
        %v926 = vpop.f32.mrb[0].mxu0
        %v927 = vadd.f32 0.0, %v926
        %v928 = vpop.f32.mrb[0].mxu0
        %v929 = vadd.f32 0.0, %v928
        %930 = vdwg.mxu0
        %v931 = vmul.f32 %v855, 0.5
        %v932 = vmul.f32 %v859, 0.5
        %v933 = vmul.f32 %v865, 0.5
        %v934 = vmul.f32 %v869, 0.5
        %v935 = vmul.f32 %v875, 0.5
        %v936 = vmul.f32 %v879, 0.5
        %v937 = vmul.f32 %v885, 0.5
        %v938 = vmul.f32 %v889, 0.5
        %v939 = vmul.f32 %v895, 0.5
        %v940 = vmul.f32 %v899, 0.5
        %v941 = vmul.f32 %v905, 0.5
        %v942 = vmul.f32 %v909, 0.5
        %v943 = vmul.f32 %v915, 0.5
        %v944 = vmul.f32 %v919, 0.5
        %v945 = vmul.f32 %v925, 0.5
        %v946 = vmul.f32 %v929, 0.5
        %v947 = vmul.f32 %v855, 0.70710677
        %v948 = vmul.f32 %v859, 0.70710677
        %v949 = vmul.f32 %v865, 0.70710677
        %v950 = vmul.f32 %v869, 0.70710677
        %v951 = vmul.f32 %v875, 0.70710677
        %v952 = vmul.f32 %v879, 0.70710677
        %v953 = vmul.f32 %v885, 0.70710677
        %v954 = vmul.f32 %v889, 0.70710677
        %v955 = vmul.f32 %v895, 0.70710677
        %v956 = vmul.f32 %v899, 0.70710677
        %v957 = vmul.f32 %v905, 0.70710677
        %v958 = vmul.f32 %v909, 0.70710677
        %v959 = vmul.f32 %v915, 0.70710677
        %v960 = vmul.f32 %v919, 0.70710677
        %v961 = vmul.f32 %v925, 0.70710677
        %v962 = vmul.f32 %v929, 0.70710677
        %v963 = verf.f32.pop %v947
        %v964 = verf.f32.pop %v948
        %v965 = verf.f32.pop %v949
        %v966 = verf.f32.pop %v950
        %v967 = verf.f32.pop %v951
        %v968 = verf.f32.pop %v952
        %v969 = verf.f32.pop %v953
        %v970 = verf.f32.pop %v954
        %v971 = verf.f32.pop %v955
        %v972 = verf.f32.pop %v956
        %v973 = verf.f32.pop %v957
        %v974 = verf.f32.pop %v958
        %v975 = verf.f32.pop %v959
        %v976 = verf.f32.pop %v960
        %v977 = verf.f32.pop %v961
        %v978 = verf.f32.pop %v962
        %v979 = vadd.f32 %v963, 1.0
        %v980 = vadd.f32 %v964, 1.0
        %v981 = vadd.f32 %v965, 1.0
        %v982 = vadd.f32 %v966, 1.0
        %v983 = vadd.f32 %v967, 1.0
        %v984 = vadd.f32 %v968, 1.0
        %v985 = vadd.f32 %v969, 1.0
        %v986 = vadd.f32 %v970, 1.0
        %v987 = vadd.f32 %v971, 1.0
        %v988 = vadd.f32 %v972, 1.0
        %v989 = vadd.f32 %v973, 1.0
        %v990 = vadd.f32 %v974, 1.0
        %v991 = vadd.f32 %v975, 1.0
        %v992 = vadd.f32 %v976, 1.0
        %v993 = vadd.f32 %v977, 1.0
        %v994 = vadd.f32 %v978, 1.0
        %v995 = vmul.f32 %v931, %v979
        %v996 = vmul.f32 %v932, %v980
        %v997 = vmul.f32 %v933, %v981
        %v998 = vmul.f32 %v934, %v982
        %v999 = vmul.f32 %v935, %v983
        %v1000 = vmul.f32 %v936, %v984
        %v1001 = vmul.f32 %v937, %v985
        %v1002 = vmul.f32 %v938, %v986
        %v1003 = vmul.f32 %v939, %v987
        %v1004 = vmul.f32 %v940, %v988
        %v1005 = vmul.f32 %v941, %v989
        %v1006 = vmul.f32 %v942, %v990
        %v1007 = vmul.f32 %v943, %v991
        %v1008 = vmul.f32 %v944, %v992
        %v1009 = vmul.f32 %v945, %v993
        %v1010 = vmul.f32 %v946, %v994
        %v1011 = vmul.f32 %v853, %v995
        %v1012 = vmul.f32 %v857, %v996
        %v1013 = vmul.f32 %v863, %v997
        %v1014 = vmul.f32 %v867, %v998
        %v1015 = vmul.f32 %v873, %v999
        %v1016 = vmul.f32 %v877, %v1000
        %v1017 = vmul.f32 %v883, %v1001
        %v1018 = vmul.f32 %v887, %v1002
        %v1019 = vmul.f32 %v893, %v1003
        %v1020 = vmul.f32 %v897, %v1004
        %v1021 = vmul.f32 %v903, %v1005
        %v1022 = vmul.f32 %v907, %v1006
        %v1023 = vmul.f32 %v913, %v1007
        %v1024 = vmul.f32 %v917, %v1008
        %v1025 = vmul.f32 %v923, %v1009
        %v1026 = vmul.f32 %v927, %v1010
        %v1027 = vpack.c.bf16 %v1012, %v1011
        %v1028 = vpack.c.bf16 %v1014, %v1013
        %v1029 = vpack.c.bf16 %v1016, %v1015
        %v1030 = vpack.c.bf16 %v1018, %v1017
        %v1031 = vpack.c.bf16 %v1020, %v1019
        %v1032 = vpack.c.bf16 %v1022, %v1021
        %v1033 = vpack.c.bf16 %v1024, %v1023
        %v1034 = vpack.c.bf16 %v1026, %v1025
        %v1035 = vlaneseq
        %v1036 = vshrl.u32 %v1035, 7
        %v1037 = vadd.s32 %v1036, 8
        %v1038 = vadd.s32 %v1036, 16
        %v1039 = vadd.s32 %v1036, 24
        %v1040 = vadd.s32 %v1036, 32
        %v1041 = vadd.s32 %v1036, 40
        %v1042 = vadd.s32 %v1036, 48
        %v1043 = vadd.s32 %v1036, 56
        %v1044 = vadd.s32 %v1036, 64
        %v1045 = vadd.s32 %v1036, 72
        %v1046 = vadd.s32 %v1036, 80
        %v1047 = vadd.s32 %v1036, 88
        %v1048 = vadd.s32 %v1036, 96
        %v1049 = vadd.s32 %v1036, 104
        %v1050 = vadd.s32 %v1036, 112
        %v1051 = vadd.s32 %v1036, 120
        %v1052 = vlaneseq
        %v1053 = vand.u32 %v1052, 127
        %vm1054 = vcmp.gt.s32.totalorder %v1053, %v1036
        %vm1055 = vcmp.gt.s32.totalorder %v1053, %v1037
        %vm1056 = vcmp.gt.s32.totalorder %v1053, %v1038
        %vm1057 = vcmp.gt.s32.totalorder %v1053, %v1039
        %vm1058 = vcmp.gt.s32.totalorder %v1053, %v1040
        %vm1059 = vcmp.gt.s32.totalorder %v1053, %v1041
        %vm1060 = vcmp.gt.s32.totalorder %v1053, %v1042
        %vm1061 = vcmp.gt.s32.totalorder %v1053, %v1043
        %vm1062 = vcmp.gt.s32.totalorder %v1053, %v1044
        %vm1063 = vcmp.gt.s32.totalorder %v1053, %v1045
        %vm1064 = vcmp.gt.s32.totalorder %v1053, %v1046
        %vm1065 = vcmp.gt.s32.totalorder %v1053, %v1047
        %vm1066 = vcmp.gt.s32.totalorder %v1053, %v1048
        %vm1067 = vcmp.gt.s32.totalorder %v1053, %v1049
        %vm1068 = vcmp.gt.s32.totalorder %v1053, %v1050
        %vm1069 = vcmp.gt.s32.totalorder %v1053, %v1051
        %vm1070 = vcmp.lt.s32.totalorder %v1053, 8
        %vm1071 = vmand %vm1054, %vm1070
        %vm1072 = vmand %vm1055, %vm1070
        %vm1073 = vmand %vm1056, %vm1070
        %vm1074 = vmand %vm1057, %vm1070
        %vm1075 = vmand %vm1058, %vm1070
        %vm1076 = vmand %vm1059, %vm1070
        %vm1077 = vmand %vm1060, %vm1070
        %vm1078 = vmand %vm1061, %vm1070
        %vm1079 = vmand %vm1062, %vm1070
        %vm1080 = vmand %vm1063, %vm1070
        %vm1081 = vmand %vm1064, %vm1070
        %vm1082 = vmand %vm1065, %vm1070
        %vm1083 = vmand %vm1066, %vm1070
        %vm1084 = vmand %vm1067, %vm1070
        %vm1085 = vmand %vm1068, %vm1070
        %vm1086 = vmand %vm1069, %vm1070
        %vm1087 = vcmp.ge.s32.totalorder %v1036, 8
        %vm1088 = vcmp.ge.s32.totalorder %v1037, 8
        %vm1089 = vcmp.ge.s32.totalorder %v1038, 8
        %vm1090 = vcmp.ge.s32.totalorder %v1039, 8
        %vm1091 = vcmp.ge.s32.totalorder %v1040, 8
        %vm1092 = vcmp.ge.s32.totalorder %v1041, 8
        %vm1093 = vcmp.ge.s32.totalorder %v1042, 8
        %vm1094 = vcmp.ge.s32.totalorder %v1043, 8
        %vm1095 = vcmp.ge.s32.totalorder %v1044, 8
        %vm1096 = vcmp.ge.s32.totalorder %v1045, 8
        %vm1097 = vcmp.ge.s32.totalorder %v1046, 8
        %vm1098 = vcmp.ge.s32.totalorder %v1047, 8
        %vm1099 = vcmp.ge.s32.totalorder %v1048, 8
        %vm1100 = vcmp.ge.s32.totalorder %v1049, 8
        %vm1101 = vcmp.ge.s32.totalorder %v1050, 8
        %vm1102 = vcmp.ge.s32.totalorder %v1051, 8
        %vm1103 = vcmp.eq.s32.totalorder %v1053, %v1036
        %vm1104 = vcmp.eq.s32.totalorder %v1053, %v1037
        %vm1105 = vcmp.eq.s32.totalorder %v1053, %v1038
        %vm1106 = vcmp.eq.s32.totalorder %v1053, %v1039
        %vm1107 = vcmp.eq.s32.totalorder %v1053, %v1040
        %vm1108 = vcmp.eq.s32.totalorder %v1053, %v1041
        %vm1109 = vcmp.eq.s32.totalorder %v1053, %v1042
        %vm1110 = vcmp.eq.s32.totalorder %v1053, %v1043
        %vm1111 = vcmp.eq.s32.totalorder %v1053, %v1044
        %vm1112 = vcmp.eq.s32.totalorder %v1053, %v1045
        %vm1113 = vcmp.eq.s32.totalorder %v1053, %v1046
        %vm1114 = vcmp.eq.s32.totalorder %v1053, %v1047
        %vm1115 = vcmp.eq.s32.totalorder %v1053, %v1048
        %vm1116 = vcmp.eq.s32.totalorder %v1053, %v1049
        %vm1117 = vcmp.eq.s32.totalorder %v1053, %v1050
        %vm1118 = vcmp.eq.s32.totalorder %v1053, %v1051
        %vm1119 = vmand %vm1087, %vm1103
        %vm1120 = vmand %vm1088, %vm1104
        %vm1121 = vmand %vm1089, %vm1105
        %vm1122 = vmand %vm1090, %vm1106
        %vm1123 = vmand %vm1091, %vm1107
        %vm1124 = vmand %vm1092, %vm1108
        %vm1125 = vmand %vm1093, %vm1109
        %vm1126 = vmand %vm1094, %vm1110
        %vm1127 = vmand %vm1095, %vm1111
        %vm1128 = vmand %vm1096, %vm1112
        %vm1129 = vmand %vm1097, %vm1113
        %vm1130 = vmand %vm1098, %vm1114
        %vm1131 = vmand %vm1099, %vm1115
        %vm1132 = vmand %vm1100, %vm1116
        %vm1133 = vmand %vm1101, %vm1117
        %vm1134 = vmand %vm1102, %vm1118
        %vm1135 = vmor %vm1071, %vm1119
        %vm1136 = vmor %vm1072, %vm1120
        %vm1137 = vmor %vm1073, %vm1121
        %vm1138 = vmor %vm1074, %vm1122
        %vm1139 = vmor %vm1075, %vm1123
        %vm1140 = vmor %vm1076, %vm1124
        %vm1141 = vmor %vm1077, %vm1125
        %vm1142 = vmor %vm1078, %vm1126
        %vm1143 = vmor %vm1079, %vm1127
        %vm1144 = vmor %vm1080, %vm1128
        %vm1145 = vmor %vm1081, %vm1129
        %vm1146 = vmor %vm1082, %vm1130
        %vm1147 = vmor %vm1083, %vm1131
        %vm1148 = vmor %vm1084, %vm1132
        %vm1149 = vmor %vm1085, %vm1133
        %vm1150 = vmor %vm1086, %vm1134
        %s1151 = sld [smem:[#allocation2]]
        %v1152 = vsub.s32 %v1053, %v1036
        %v1153 = vsub.s32 %v1053, %v1037
        %v1154 = vsub.s32 %v1053, %v1038
        %v1155 = vsub.s32 %v1053, %v1039
        %v1156 = vsub.s32 %v1053, %v1040
        %v1157 = vsub.s32 %v1053, %v1041
        %v1158 = vsub.s32 %v1053, %v1042
        %v1159 = vsub.s32 %v1053, %v1043
        %v1160 = vsub.s32 %v1053, %v1044
        %v1161 = vsub.s32 %v1053, %v1045
        %v1162 = vsub.s32 %v1053, %v1046
        %v1163 = vsub.s32 %v1053, %v1047
        %v1164 = vsub.s32 %v1053, %v1048
        %v1165 = vsub.s32 %v1053, %v1049
        %v1166 = vsub.s32 %v1053, %v1050
        %v1167 = vsub.s32 %v1053, %v1051
        %v1168 = vcvt.s32.f32 %v1152
        %v1169 = vcvt.s32.f32 %v1153
        %v1170 = vcvt.s32.f32 %v1154
        %v1171 = vcvt.s32.f32 %v1155
        %v1172 = vcvt.s32.f32 %v1156
        %v1173 = vcvt.s32.f32 %v1157
        %v1174 = vcvt.s32.f32 %v1158
        %v1175 = vcvt.s32.f32 %v1159
        %v1176 = vcvt.s32.f32 %v1160
        %v1177 = vcvt.s32.f32 %v1161
        %v1178 = vcvt.s32.f32 %v1162
        %v1179 = vcvt.s32.f32 %v1163
        %v1180 = vcvt.s32.f32 %v1164
        %v1181 = vcvt.s32.f32 %v1165
        %v1182 = vcvt.s32.f32 %v1166
        %v1183 = vcvt.s32.f32 %v1167
        %v1184 = vstv %s1151
        %v1185 = vmul.f32 %v1184, %v1168
        %v1186 = vmul.f32 %v1184, %v1169
        %v1187 = vmul.f32 %v1184, %v1170
        %v1188 = vmul.f32 %v1184, %v1171
        %v1189 = vmul.f32 %v1184, %v1172
        %v1190 = vmul.f32 %v1184, %v1173
        %v1191 = vmul.f32 %v1184, %v1174
        %v1192 = vmul.f32 %v1184, %v1175
        %v1193 = vmul.f32 %v1184, %v1176
        %v1194 = vmul.f32 %v1184, %v1177
        %v1195 = vmul.f32 %v1184, %v1178
        %v1196 = vmul.f32 %v1184, %v1179
        %v1197 = vmul.f32 %v1184, %v1180
        %v1198 = vmul.f32 %v1184, %v1181
        %v1199 = vmul.f32 %v1184, %v1182
        %v1200 = vmul.f32 %v1184, %v1183
        %v1201 = vsel %vm1135, %v1185, -inf
        %v1202 = vsel %vm1136, %v1186, -inf
        %v1203 = vsel %vm1137, %v1187, -inf
        %v1204 = vsel %vm1138, %v1188, -inf
        %v1205 = vsel %vm1139, %v1189, -inf
        %v1206 = vsel %vm1140, %v1190, -inf
        %v1207 = vsel %vm1141, %v1191, -inf
        %v1208 = vsel %vm1142, %v1192, -inf
        %v1209 = vsel %vm1143, %v1193, -inf
        %v1210 = vsel %vm1144, %v1194, -inf
        %v1211 = vsel %vm1145, %v1195, -inf
        %v1212 = vsel %vm1146, %v1196, -inf
        %v1213 = vsel %vm1147, %v1197, -inf
        %v1214 = vsel %vm1148, %v1198, -inf
        %v1215 = vsel %vm1149, %v1199, -inf
        %v1216 = vsel %vm1150, %v1200, -inf
        %v1217 = vpack.c.bf16 %v744, %v740
        %v1218 = vpack.c.bf16 %v754, %v750
        %v1219 = vpack.c.bf16 %v764, %v760
        %v1220 = vpack.c.bf16 %v774, %v770
        %v1221 = vpack.c.bf16 %v784, %v780
        %v1222 = vpack.c.bf16 %v794, %v790
        %v1223 = vpack.c.bf16 %v804, %v800
        %v1224 = vpack.c.bf16 %v814, %v810
        %v1225 = vpack.c.bf16 %v746, %v742
        %v1226 = vpack.c.bf16 %v756, %v752
        %v1227 = vpack.c.bf16 %v766, %v762
        %v1228 = vpack.c.bf16 %v776, %v772
        %v1229 = vpack.c.bf16 %v786, %v782
        %v1230 = vpack.c.bf16 %v796, %v792
        %v1231 = vpack.c.bf16 %v806, %v802
        %v1232 = vpack.c.bf16 %v816, %v812
        %1233 = vmatprep.subr.bf16.mxu0 0
        %1234 = vmatpush1.bf16.xpose.msra.mxu0 %v1225
        %1235 = vmatprep.subr.bf16.mxu0 0
        %1236 = vmatpush1.bf16.xpose.msra.mxu0 %v1226
        %1237 = vmatprep.subr.bf16.mxu0 0
        %1238 = vmatpush1.bf16.xpose.msra.mxu0 %v1227
        %1239 = vmatprep.subr.bf16.mxu0 0
        %1240 = vmatpush1.bf16.xpose.msra.mxu0 %v1228
        %1241 = vmatprep.subr.bf16.mxu0 0
        %1242 = vmatpush1.bf16.xpose.msra.mxu0 %v1229
        %1243 = vmatprep.subr.bf16.mxu0 0
        %1244 = vmatpush1.bf16.xpose.msra.mxu0 %v1230
        %1245 = vmatprep.subr.bf16.mxu0 0
        %1246 = vmatpush1.bf16.xpose.msra.mxu0 %v1231
        %1247 = vmatprep.subr.bf16.mxu0 0
        %1248 = vmatpush1.bf16.xpose.msra.mxu0 %v1232
        %1249 = vmatprep.subr.bf16.mxu0 0
        %1250 = vmatpush1.bf16.xpose.msra.mxu0 0
        %1251 = vmatprep.subr.bf16.mxu0 0
        %1252 = vmatpush1.bf16.xpose.msra.mxu0 0
        %1253 = vmatprep.subr.bf16.mxu0 0
        %1254 = vmatpush1.bf16.xpose.msra.mxu0 0
        %1255 = vmatprep.subr.bf16.mxu0 0
        %1256 = vmatpush1.bf16.xpose.msra.mxu0 0
        %1257 = vmatprep.subr.bf16.mxu0 0
        %1258 = vmatpush1.bf16.xpose.msra.mxu0 0
        %1259 = vmatprep.subr.bf16.mxu0 0
        %1260 = vmatpush1.bf16.xpose.msra.mxu0 0
        %1261 = vmatprep.subr.bf16.mxu0 0
        %1262 = vmatpush1.bf16.xpose.msra.mxu0 0
        %1263 = vmatprep.subr.bf16.mxu0 0
        %1264 = vmatpush1.bf16.xpose.msra.mxu0 0
        %1265 = vmatprep.mubr.bf16.mxu0 0
        %1266 = vmatmul.mubr.bf16.gmra.mrb[0].mxu0 %v1217
        %v1267 = vpop.f32.mrb[0].mxu0
        %v1268 = vadd.f32 0.0, %v1267
        %v1269 = vpop.f32.mrb[0].mxu0
        %v1270 = vpop.f32.mrb[0].mxu0
        %v1271 = vadd.f32 0.0, %v1270
        %v1272 = vpop.f32.mrb[0].mxu0
        %1273 = vmatprep.mubr.bf16.mxu0 0
        %1274 = vmatmul.mubr.bf16.gmra.mrb[0].mxu0 %v1218
        %v1275 = vpop.f32.mrb[0].mxu0
        %v1276 = vadd.f32 0.0, %v1275
        %v1277 = vpop.f32.mrb[0].mxu0
        %v1278 = vpop.f32.mrb[0].mxu0
        %v1279 = vadd.f32 0.0, %v1278
        %v1280 = vpop.f32.mrb[0].mxu0
        %1281 = vmatprep.mubr.bf16.mxu0 0
        %1282 = vmatmul.mubr.bf16.gmra.mrb[0].mxu0 %v1219
        %v1283 = vpop.f32.mrb[0].mxu0
        %v1284 = vadd.f32 0.0, %v1283
        %v1285 = vpop.f32.mrb[0].mxu0
        %v1286 = vpop.f32.mrb[0].mxu0
        %v1287 = vadd.f32 0.0, %v1286
        %v1288 = vpop.f32.mrb[0].mxu0
        %1289 = vmatprep.mubr.bf16.mxu0 0
        %1290 = vmatmul.mubr.bf16.gmra.mrb[0].mxu0 %v1220
        %v1291 = vpop.f32.mrb[0].mxu0
        %v1292 = vadd.f32 0.0, %v1291
        %v1293 = vpop.f32.mrb[0].mxu0
        %v1294 = vpop.f32.mrb[0].mxu0
        %v1295 = vadd.f32 0.0, %v1294
        %v1296 = vpop.f32.mrb[0].mxu0
        %1297 = vmatprep.mubr.bf16.mxu0 0
        %1298 = vmatmul.mubr.bf16.gmra.mrb[0].mxu0 %v1221
        %v1299 = vpop.f32.mrb[0].mxu0
        %v1300 = vadd.f32 0.0, %v1299
        %v1301 = vpop.f32.mrb[0].mxu0
        %v1302 = vpop.f32.mrb[0].mxu0
        %v1303 = vadd.f32 0.0, %v1302
        %v1304 = vpop.f32.mrb[0].mxu0
        %1305 = vmatprep.mubr.bf16.mxu0 0
        %1306 = vmatmul.mubr.bf16.gmra.mrb[0].mxu0 %v1222
        %v1307 = vpop.f32.mrb[0].mxu0
        %v1308 = vadd.f32 0.0, %v1307
        %v1309 = vpop.f32.mrb[0].mxu0
        %v1310 = vpop.f32.mrb[0].mxu0
        %v1311 = vadd.f32 0.0, %v1310
        %v1312 = vpop.f32.mrb[0].mxu0
        %1313 = vmatprep.mubr.bf16.mxu0 0
        %1314 = vmatmul.mubr.bf16.gmra.mrb[0].mxu0 %v1223
        %v1315 = vpop.f32.mrb[0].mxu0
        %v1316 = vadd.f32 0.0, %v1315
        %v1317 = vpop.f32.mrb[0].mxu0
        %v1318 = vpop.f32.mrb[0].mxu0
        %v1319 = vadd.f32 0.0, %v1318
        %v1320 = vpop.f32.mrb[0].mxu0
        %1321 = vmatprep.mubr.bf16.mxu0 0
        %1322 = vmatmul.mubr.bf16.gmra.mrb[0].mxu0 %v1224
        %v1323 = vpop.f32.mrb[0].mxu0
        %v1324 = vadd.f32 0.0, %v1323
        %v1325 = vpop.f32.mrb[0].mxu0
        %v1326 = vpop.f32.mrb[0].mxu0
        %v1327 = vadd.f32 0.0, %v1326
        %v1328 = vpop.f32.mrb[0].mxu0
        %1329 = vdwg.mxu0
        %v1330 = vmul.f32 %v1268, 0.35355338
        %v1331 = vmul.f32 %v1271, 0.35355338
        %v1332 = vmul.f32 %v1276, 0.35355338
        %v1333 = vmul.f32 %v1279, 0.35355338
        %v1334 = vmul.f32 %v1284, 0.35355338
        %v1335 = vmul.f32 %v1287, 0.35355338
        %v1336 = vmul.f32 %v1292, 0.35355338
        %v1337 = vmul.f32 %v1295, 0.35355338
        %v1338 = vmul.f32 %v1300, 0.35355338
        %v1339 = vmul.f32 %v1303, 0.35355338
        %v1340 = vmul.f32 %v1308, 0.35355338
        %v1341 = vmul.f32 %v1311, 0.35355338
        %v1342 = vmul.f32 %v1316, 0.35355338
        %v1343 = vmul.f32 %v1319, 0.35355338
        %v1344 = vmul.f32 %v1324, 0.35355338
        %v1345 = vmul.f32 %v1327, 0.35355338
        %v1346 = vadd.f32 %v1330, %v1201
        %v1347 = vadd.f32 %v1331, %v1202
        %v1348 = vadd.f32 %v1332, %v1203
        %v1349 = vadd.f32 %v1333, %v1204
        %v1350 = vadd.f32 %v1334, %v1205
        %v1351 = vadd.f32 %v1335, %v1206
        %v1352 = vadd.f32 %v1336, %v1207
        %v1353 = vadd.f32 %v1337, %v1208
        %v1354 = vadd.f32 %v1338, %v1209
        %v1355 = vadd.f32 %v1339, %v1210
        %v1356 = vadd.f32 %v1340, %v1211
        %v1357 = vadd.f32 %v1341, %v1212
        %v1358 = vadd.f32 %v1342, %v1213
        %v1359 = vadd.f32 %v1343, %v1214
        %v1360 = vadd.f32 %v1344, %v1215
        %v1361 = vadd.f32 %v1345, %v1216
        %1362 = vmax.xlane.f32.xlu0 %v1346
        %v1363 = vpop.xlane.xlu0 %1362
        %1364 = vmax.xlane.f32.xlu0 %v1347
        %v1365 = vpop.xlane.xlu0 %1364
        %1366 = vmax.xlane.f32.xlu0 %v1348
        %v1367 = vpop.xlane.xlu0 %1366
        %1368 = vmax.xlane.f32.xlu0 %v1349
        %v1369 = vpop.xlane.xlu0 %1368
        %1370 = vmax.xlane.f32.xlu0 %v1350
        %v1371 = vpop.xlane.xlu0 %1370
        %1372 = vmax.xlane.f32.xlu0 %v1351
        %v1373 = vpop.xlane.xlu0 %1372
        %1374 = vmax.xlane.f32.xlu0 %v1352
        %v1375 = vpop.xlane.xlu0 %1374
        %1376 = vmax.xlane.f32.xlu0 %v1353
        %v1377 = vpop.xlane.xlu0 %1376
        %1378 = vmax.xlane.f32.xlu0 %v1354
        %v1379 = vpop.xlane.xlu0 %1378
        %1380 = vmax.xlane.f32.xlu0 %v1355
        %v1381 = vpop.xlane.xlu0 %1380
        %1382 = vmax.xlane.f32.xlu0 %v1356
        %v1383 = vpop.xlane.xlu0 %1382
        %1384 = vmax.xlane.f32.xlu0 %v1357
        %v1385 = vpop.xlane.xlu0 %1384
        %1386 = vmax.xlane.f32.xlu0 %v1358
        %v1387 = vpop.xlane.xlu0 %1386
        %1388 = vmax.xlane.f32.xlu0 %v1359
        %v1389 = vpop.xlane.xlu0 %1388
        %1390 = vmax.xlane.f32.xlu0 %v1360
        %v1391 = vpop.xlane.xlu0 %1390
        %1392 = vmax.xlane.f32.xlu0 %v1361
        %v1393 = vpop.xlane.xlu0 %1392
        %v1394 = vsub.f32 %v1346, %v1363
        %v1395 = vsub.f32 %v1347, %v1365
        %v1396 = vsub.f32 %v1348, %v1367
        %v1397 = vsub.f32 %v1349, %v1369
        %v1398 = vsub.f32 %v1350, %v1371
        %v1399 = vsub.f32 %v1351, %v1373
        %v1400 = vsub.f32 %v1352, %v1375
        %v1401 = vsub.f32 %v1353, %v1377
        %v1402 = vsub.f32 %v1354, %v1379
        %v1403 = vsub.f32 %v1355, %v1381
        %v1404 = vsub.f32 %v1356, %v1383
        %v1405 = vsub.f32 %v1357, %v1385
        %v1406 = vsub.f32 %v1358, %v1387
        %v1407 = vsub.f32 %v1359, %v1389
        %v1408 = vsub.f32 %v1360, %v1391
        %v1409 = vsub.f32 %v1361, %v1393
        %v1410 = vmul.f32 %v1394, 1.442695
        %v1411 = vpow.pop %v1410
        %v1412 = vmul.f32 %v1395, 1.442695
        %v1413 = vpow.pop %v1412
        %v1414 = vmul.f32 %v1396, 1.442695
        %v1415 = vpow.pop %v1414
        %v1416 = vmul.f32 %v1397, 1.442695
        %v1417 = vpow.pop %v1416
        %v1418 = vmul.f32 %v1398, 1.442695
        %v1419 = vpow.pop %v1418
        %v1420 = vmul.f32 %v1399, 1.442695
        %v1421 = vpow.pop %v1420
        %v1422 = vmul.f32 %v1400, 1.442695
        %v1423 = vpow.pop %v1422
        %v1424 = vmul.f32 %v1401, 1.442695
        %v1425 = vpow.pop %v1424
        %v1426 = vmul.f32 %v1402, 1.442695
        %v1427 = vpow.pop %v1426
        %v1428 = vmul.f32 %v1403, 1.442695
        %v1429 = vpow.pop %v1428
        %v1430 = vmul.f32 %v1404, 1.442695
        %v1431 = vpow.pop %v1430
        %v1432 = vmul.f32 %v1405, 1.442695
        %v1433 = vpow.pop %v1432
        %v1434 = vmul.f32 %v1406, 1.442695
        %v1435 = vpow.pop %v1434
        %v1436 = vmul.f32 %v1407, 1.442695
        %v1437 = vpow.pop %v1436
        %v1438 = vmul.f32 %v1408, 1.442695
        %v1439 = vpow.pop %v1438
        %v1440 = vmul.f32 %v1409, 1.442695
        %v1441 = vpow.pop %v1440
        %1442 = vadd.xlane.f32.xlu0 %v1411
        %v1443 = vpop.xlane.xlu0 %1442
        %1444 = vadd.xlane.f32.xlu0 %v1413
        %v1445 = vpop.xlane.xlu0 %1444
        %1446 = vadd.xlane.f32.xlu0 %v1415
        %v1447 = vpop.xlane.xlu0 %1446
        %1448 = vadd.xlane.f32.xlu0 %v1417
        %v1449 = vpop.xlane.xlu0 %1448
        %1450 = vadd.xlane.f32.xlu0 %v1419
        %v1451 = vpop.xlane.xlu0 %1450
        %1452 = vadd.xlane.f32.xlu0 %v1421
        %v1453 = vpop.xlane.xlu0 %1452
        %1454 = vadd.xlane.f32.xlu0 %v1423
        %v1455 = vpop.xlane.xlu0 %1454
        %1456 = vadd.xlane.f32.xlu0 %v1425
        %v1457 = vpop.xlane.xlu0 %1456
        %1458 = vadd.xlane.f32.xlu0 %v1427
        %v1459 = vpop.xlane.xlu0 %1458
        %1460 = vadd.xlane.f32.xlu0 %v1429
        %v1461 = vpop.xlane.xlu0 %1460
        %1462 = vadd.xlane.f32.xlu0 %v1431
        %v1463 = vpop.xlane.xlu0 %1462
        %1464 = vadd.xlane.f32.xlu0 %v1433
        %v1465 = vpop.xlane.xlu0 %1464
        %1466 = vadd.xlane.f32.xlu0 %v1435
        %v1467 = vpop.xlane.xlu0 %1466
        %1468 = vadd.xlane.f32.xlu0 %v1437
        %v1469 = vpop.xlane.xlu0 %1468
        %1470 = vadd.xlane.f32.xlu0 %v1439
        %v1471 = vpop.xlane.xlu0 %1470
        %1472 = vadd.xlane.f32.xlu0 %v1441
        %v1473 = vpop.xlane.xlu0 %1472
        %v1474 = vrcp.pop %v1443
        %v1475 = vrcp.pop %v1445
        %v1476 = vrcp.pop %v1447
        %v1477 = vrcp.pop %v1449
        %v1478 = vrcp.pop %v1451
        %v1479 = vrcp.pop %v1453
        %v1480 = vrcp.pop %v1455
        %v1481 = vrcp.pop %v1457
        %v1482 = vrcp.pop %v1459
        %v1483 = vrcp.pop %v1461
        %v1484 = vrcp.pop %v1463
        %v1485 = vrcp.pop %v1465
        %v1486 = vrcp.pop %v1467
        %v1487 = vrcp.pop %v1469
        %v1488 = vrcp.pop %v1471
        %v1489 = vrcp.pop %v1473
        %v1490 = vmul.f32 %v1411, %v1474
        %v1491 = vmul.f32 %v1413, %v1475
        %v1492 = vmul.f32 %v1415, %v1476
        %v1493 = vmul.f32 %v1417, %v1477
        %v1494 = vmul.f32 %v1419, %v1478
        %v1495 = vmul.f32 %v1421, %v1479
        %v1496 = vmul.f32 %v1423, %v1480
        %v1497 = vmul.f32 %v1425, %v1481
        %v1498 = vmul.f32 %v1427, %v1482
        %v1499 = vmul.f32 %v1429, %v1483
        %v1500 = vmul.f32 %v1431, %v1484
        %v1501 = vmul.f32 %v1433, %v1485
        %v1502 = vmul.f32 %v1435, %v1486
        %v1503 = vmul.f32 %v1437, %v1487
        %v1504 = vmul.f32 %v1439, %v1488
        %v1505 = vmul.f32 %v1441, %v1489
        %v1506 = vpack.c.bf16 %v1491, %v1490
        %v1507 = vpack.c.bf16 %v1493, %v1492
        %v1508 = vpack.c.bf16 %v1495, %v1494
        %v1509 = vpack.c.bf16 %v1497, %v1496
        %v1510 = vpack.c.bf16 %v1499, %v1498
        %v1511 = vpack.c.bf16 %v1501, %v1500
        %v1512 = vpack.c.bf16 %v1503, %v1502
        %v1513 = vpack.c.bf16 %v1505, %v1504
        %1522 = vrot.lane.b32.xlu0 %v1027, 64
        %v1523 = vpop.permute.xlu0 %1522
        %1524 = vrot.lane.b32.xlu0 %v1028, 64
        %v1525 = vpop.permute.xlu0 %1524
        %1526 = vrot.lane.b32.xlu0 %v1029, 64
        %v1527 = vpop.permute.xlu0 %1526
        %1528 = vrot.lane.b32.xlu0 %v1030, 64
        %v1529 = vpop.permute.xlu0 %1528
        %1530 = vrot.lane.b32.xlu0 %v1031, 64
        %v1531 = vpop.permute.xlu0 %1530
        %1532 = vrot.lane.b32.xlu0 %v1032, 64
        %v1533 = vpop.permute.xlu0 %1532
        %1534 = vrot.lane.b32.xlu0 %v1033, 64
        %v1535 = vpop.permute.xlu0 %1534
        %1536 = vrot.lane.b32.xlu0 %v1034, 64
        %v1537 = vpop.permute.xlu0 %1536
        %1546 = vmatprep.subr.bf16.mxu0 0
        %1547 = vmatpush1.bf16.msra.mxu0 %v1523
        %1548 = vmatprep.subr.bf16.mxu0 0
        %1549 = vmatpush1.bf16.msra.mxu0 %v1525
        %1550 = vmatprep.subr.bf16.mxu0 0
        %1551 = vmatpush1.bf16.msra.mxu0 %v1527
        %1552 = vmatprep.subr.bf16.mxu0 0
        %1553 = vmatpush1.bf16.msra.mxu0 %v1529
        %1554 = vmatprep.subr.bf16.mxu0 0
        %1555 = vmatpush1.bf16.msra.mxu0 %v1531
        %1556 = vmatprep.subr.bf16.mxu0 0
        %1557 = vmatpush1.bf16.msra.mxu0 %v1533
        %1558 = vmatprep.subr.bf16.mxu0 0
        %1559 = vmatpush1.bf16.msra.mxu0 %v1535
        %1560 = vmatprep.subr.bf16.mxu0 0
        %1561 = vmatpush1.bf16.msra.mxu0 %v1537
        %1562 = vmatprep.subr.bf16.mxu0 0
        %1563 = vmatpush1.bf16.msra.mxu0 0
        %1564 = vmatprep.subr.bf16.mxu0 0
        %1565 = vmatpush1.bf16.msra.mxu0 0
        %1566 = vmatprep.subr.bf16.mxu0 0
        %1567 = vmatpush1.bf16.msra.mxu0 0
        %1568 = vmatprep.subr.bf16.mxu0 0
        %1569 = vmatpush1.bf16.msra.mxu0 0
        %1570 = vmatprep.subr.bf16.mxu0 0
        %1571 = vmatpush1.bf16.msra.mxu0 0
        %1572 = vmatprep.subr.bf16.mxu0 0
        %1573 = vmatpush1.bf16.msra.mxu0 0
        %1574 = vmatprep.subr.bf16.mxu0 0
        %1575 = vmatpush1.bf16.msra.mxu0 0
        %1576 = vmatprep.subr.bf16.mxu0 0
        %1577 = vmatpush1.bf16.msra.mxu0 0
        %1578 = vmatprep.mubr.bf16.mxu0 0
        %1579 = vmatmul.mubr.bf16.gmra.mrb[0].mxu0 %v1506
        %v1580 = vpop.f32.mrb[0].mxu0
        %v1581 = vadd.f32 0.0, %v1580
        %v1582 = vpop.f32.mrb[0].mxu0
        %v1583 = vpop.f32.mrb[0].mxu0
        %v1584 = vadd.f32 0.0, %v1583
        %v1585 = vpop.f32.mrb[0].mxu0
        %1586 = vmatprep.mubr.bf16.mxu0 0
        %1587 = vmatmul.mubr.bf16.gmra.mrb[0].mxu0 %v1507
        %v1588 = vpop.f32.mrb[0].mxu0
        %v1589 = vadd.f32 0.0, %v1588
        %v1590 = vpop.f32.mrb[0].mxu0
        %v1591 = vpop.f32.mrb[0].mxu0
        %v1592 = vadd.f32 0.0, %v1591
        %v1593 = vpop.f32.mrb[0].mxu0
        %1594 = vmatprep.mubr.bf16.mxu0 0
        %1595 = vmatmul.mubr.bf16.gmra.mrb[0].mxu0 %v1508
        %v1596 = vpop.f32.mrb[0].mxu0
        %v1597 = vadd.f32 0.0, %v1596
        %v1598 = vpop.f32.mrb[0].mxu0
        %v1599 = vpop.f32.mrb[0].mxu0
        %v1600 = vadd.f32 0.0, %v1599
        %v1601 = vpop.f32.mrb[0].mxu0
        %1602 = vmatprep.mubr.bf16.mxu0 0
        %1603 = vmatmul.mubr.bf16.gmra.mrb[0].mxu0 %v1509
        %v1604 = vpop.f32.mrb[0].mxu0
        %v1605 = vadd.f32 0.0, %v1604
        %v1606 = vpop.f32.mrb[0].mxu0
        %v1607 = vpop.f32.mrb[0].mxu0
        %v1608 = vadd.f32 0.0, %v1607
        %v1609 = vpop.f32.mrb[0].mxu0
        %1610 = vmatprep.mubr.bf16.mxu0 0
        %1611 = vmatmul.mubr.bf16.gmra.mrb[0].mxu0 %v1510
        %v1612 = vpop.f32.mrb[0].mxu0
        %v1613 = vadd.f32 0.0, %v1612
        %v1614 = vpop.f32.mrb[0].mxu0
        %v1615 = vpop.f32.mrb[0].mxu0
        %v1616 = vadd.f32 0.0, %v1615
        %v1617 = vpop.f32.mrb[0].mxu0
        %1618 = vmatprep.mubr.bf16.mxu0 0
        %1619 = vmatmul.mubr.bf16.gmra.mrb[0].mxu0 %v1511
        %v1620 = vpop.f32.mrb[0].mxu0
        %v1621 = vadd.f32 0.0, %v1620
        %v1622 = vpop.f32.mrb[0].mxu0
        %v1623 = vpop.f32.mrb[0].mxu0
        %v1624 = vadd.f32 0.0, %v1623
        %v1625 = vpop.f32.mrb[0].mxu0
        %1626 = vmatprep.mubr.bf16.mxu0 0
        %1627 = vmatmul.mubr.bf16.gmra.mrb[0].mxu0 %v1512
        %v1628 = vpop.f32.mrb[0].mxu0
        %v1629 = vadd.f32 0.0, %v1628
        %v1630 = vpop.f32.mrb[0].mxu0
        %v1631 = vpop.f32.mrb[0].mxu0
        %v1632 = vadd.f32 0.0, %v1631
        %v1633 = vpop.f32.mrb[0].mxu0
        %1634 = vmatprep.mubr.bf16.mxu0 0
        %1635 = vmatmul.mubr.bf16.gmra.mrb[0].mxu0 %v1513
        %v1636 = vpop.f32.mrb[0].mxu0
        %v1637 = vadd.f32 0.0, %v1636
        %v1638 = vpop.f32.mrb[0].mxu0
        %v1639 = vpop.f32.mrb[0].mxu0
        %v1640 = vadd.f32 0.0, %v1639
        %v1641 = vpop.f32.mrb[0].mxu0
        %1642 = vdwg.mxu0
        %v1643 = vpack.c.bf16 %v1584, %v1581
        %v1644 = vpack.c.bf16 %v1592, %v1589
        %v1645 = vpack.c.bf16 %v1600, %v1597
        %v1646 = vpack.c.bf16 %v1608, %v1605
        %v1647 = vpack.c.bf16 %v1616, %v1613
        %v1648 = vpack.c.bf16 %v1624, %v1621
        %v1649 = vpack.c.bf16 %v1632, %v1629
        %v1650 = vpack.c.bf16 %v1640, %v1637
        %v1651 = vld [vmem:[#allocation9] sm:$0xf]
        %v1652 = vld [vmem:[#allocation9 + $0x4] sm:$0xf]
        %v1653 = vld [vmem:[#allocation9 + $0x8] sm:$0xf]
        %v1654 = vld [vmem:[#allocation9 + $0xc] sm:$0xf]
        %v1655 = vld [vmem:[#allocation9 + $0x10] sm:$0xf]
        %v1656 = vld [vmem:[#allocation9 + $0x14] sm:$0xf]
        %v1657 = vld [vmem:[#allocation9 + $0x18] sm:$0xf]
        %v1658 = vld [vmem:[#allocation9 + $0x1c] sm:$0xf]
        %v1659 = vld [vmem:[#allocation11] sm:$0xf]
        %v1660 = vld [vmem:[#allocation11 + $0x4] sm:$0xf]
        %v1661 = vld [vmem:[#allocation11 + $0x8] sm:$0xf]
        %v1662 = vld [vmem:[#allocation11 + $0xc] sm:$0xf]
        %v1663 = vld [vmem:[#allocation11 + $0x10] sm:$0xf]
        %v1664 = vld [vmem:[#allocation11 + $0x14] sm:$0xf]
        %v1665 = vld [vmem:[#allocation11 + $0x18] sm:$0xf]
        %v1666 = vld [vmem:[#allocation11 + $0x1c] sm:$0xf]
        %v1675 = vunpack.c.l.b16 %v1659
        %v1676 = vunpack.c.l.b16 %v1660
        %v1677 = vunpack.c.l.b16 %v1661
        %v1678 = vunpack.c.l.b16 %v1662
        %v1679 = vunpack.c.l.b16 %v1663
        %v1680 = vunpack.c.l.b16 %v1664
        %v1681 = vunpack.c.l.b16 %v1665
        %v1682 = vunpack.c.l.b16 %v1666
        %v1683 = vpack.c.b16 %v1676, %v1675
        %v1684 = vpack.c.b16 %v1678, %v1677
        %v1685 = vpack.c.b16 %v1680, %v1679
        %v1686 = vpack.c.b16 %v1682, %v1681
        %v1692 = vsel %vm344, %v1643, 0
        %v1695 = vsel %vm344, %v1644, 0
        %v1698 = vsel %vm344, %v1645, 0
        %v1701 = vsel %vm344, %v1646, 0
        %v1704 = vsel %vm344, %v1647, 0
        %v1707 = vsel %vm344, %v1648, 0
        %v1710 = vsel %vm344, %v1649, 0
        %v1713 = vsel %vm344, %v1650, 0
        %1715 = vmatprep.subr.bf16.mxu0 0
        %1716 = vmatpush1.bf16.msra.mxu0 %v1683
        %1717 = vmatprep.subr.bf16.mxu0 0
        %1718 = vmatpush1.bf16.msra.mxu0 %v1684
        %1719 = vmatprep.subr.bf16.mxu0 0
        %1720 = vmatpush1.bf16.msra.mxu0 %v1685
        %1721 = vmatprep.subr.bf16.mxu0 0
        %1722 = vmatpush1.bf16.msra.mxu0 %v1686
        %1723 = vmatprep.subr.bf16.mxu0 0
        %1724 = vmatpush1.bf16.msra.mxu0 0
        %1725 = vmatprep.subr.bf16.mxu0 0
        %1726 = vmatpush1.bf16.msra.mxu0 0
        %1727 = vmatprep.subr.bf16.mxu0 0
        %1728 = vmatpush1.bf16.msra.mxu0 0
        %1729 = vmatprep.subr.bf16.mxu0 0
        %1730 = vmatpush1.bf16.msra.mxu0 0
        %1731 = vmatprep.subr.bf16.mxu0 0
        %1732 = vmatpush1.bf16.msra.mxu0 0
        %1733 = vmatprep.subr.bf16.mxu0 0
        %1734 = vmatpush1.bf16.msra.mxu0 0
        %1735 = vmatprep.subr.bf16.mxu0 0
        %1736 = vmatpush1.bf16.msra.mxu0 0
        %1737 = vmatprep.subr.bf16.mxu0 0
        %1738 = vmatpush1.bf16.msra.mxu0 0
        %1739 = vmatprep.subr.bf16.mxu0 0
        %1740 = vmatpush1.bf16.msra.mxu0 0
        %1741 = vmatprep.subr.bf16.mxu0 0
        %1742 = vmatpush1.bf16.msra.mxu0 0
        %1743 = vmatprep.subr.bf16.mxu0 0
        %1744 = vmatpush1.bf16.msra.mxu0 0
        %1745 = vmatprep.subr.bf16.mxu0 0
        %1746 = vmatpush1.bf16.msra.mxu0 0
        %1747 = vmatprep.mubr.bf16.mxu0 0
        %1748 = vmatmul.mubr.bf16.gmra.mrb[0].mxu0 %v1692
        %v1749 = vpop.f32.mrb[0].mxu0
        %v1750 = vadd.f32 0.0, %v1749
        %v1751 = vpop.f32.mrb[0].mxu0
        %v1752 = vpop.f32.mrb[0].mxu0
        %v1753 = vpop.f32.mrb[0].mxu0
        %1754 = vmatprep.mubr.bf16.mxu0 0
        %1755 = vmatmul.mubr.bf16.gmra.mrb[0].mxu0 %v1695
        %v1756 = vpop.f32.mrb[0].mxu0
        %v1757 = vpop.f32.mrb[0].mxu0
        %v1758 = vpop.f32.mrb[0].mxu0
        %v1759 = vpop.f32.mrb[0].mxu0
        %1760 = vmatprep.mubr.bf16.mxu0 0
        %1761 = vmatmul.mubr.bf16.gmra.mrb[0].mxu0 %v1698
        %v1762 = vpop.f32.mrb[0].mxu0
        %v1763 = vpop.f32.mrb[0].mxu0
        %v1764 = vpop.f32.mrb[0].mxu0
        %v1765 = vpop.f32.mrb[0].mxu0
        %1766 = vmatprep.mubr.bf16.mxu0 0
        %1767 = vmatmul.mubr.bf16.gmra.mrb[0].mxu0 %v1701
        %v1768 = vpop.f32.mrb[0].mxu0
        %v1769 = vpop.f32.mrb[0].mxu0
        %v1770 = vpop.f32.mrb[0].mxu0
        %v1771 = vpop.f32.mrb[0].mxu0
        %1772 = vmatprep.mubr.bf16.mxu0 0
        %1773 = vmatmul.mubr.bf16.gmra.mrb[0].mxu0 %v1704
        %v1774 = vpop.f32.mrb[0].mxu0
        %v1775 = vpop.f32.mrb[0].mxu0
        %v1776 = vpop.f32.mrb[0].mxu0
        %v1777 = vpop.f32.mrb[0].mxu0
        %1778 = vmatprep.mubr.bf16.mxu0 0
        %1779 = vmatmul.mubr.bf16.gmra.mrb[0].mxu0 %v1707
        %v1780 = vpop.f32.mrb[0].mxu0
        %v1781 = vpop.f32.mrb[0].mxu0
        %v1782 = vpop.f32.mrb[0].mxu0
        %v1783 = vpop.f32.mrb[0].mxu0
        %1784 = vmatprep.mubr.bf16.mxu0 0
        %1785 = vmatmul.mubr.bf16.gmra.mrb[0].mxu0 %v1710
        %v1786 = vpop.f32.mrb[0].mxu0
        %v1787 = vpop.f32.mrb[0].mxu0
        %v1788 = vpop.f32.mrb[0].mxu0
        %v1789 = vpop.f32.mrb[0].mxu0
        %1790 = vmatprep.mubr.bf16.mxu0 0
        %1791 = vmatmul.mubr.bf16.gmra.mrb[0].mxu0 %v1713
        %v1792 = vpop.f32.mrb[0].mxu0
        %v1793 = vpop.f32.mrb[0].mxu0
        %v1794 = vpop.f32.mrb[0].mxu0
        %v1795 = vpop.f32.mrb[0].mxu0
        %1796 = vdwg.mxu0
        %v1805 = vunpack.c.l.b16 %v1651
        %v1806 = vunpack.c.l.b16 %v1652
        %v1807 = vunpack.c.l.b16 %v1653
        %v1808 = vunpack.c.l.b16 %v1654
        %v1809 = vunpack.c.l.b16 %v1655
        %v1810 = vunpack.c.l.b16 %v1656
        %v1811 = vunpack.c.l.b16 %v1657
        %v1812 = vunpack.c.l.b16 %v1658
        %v1813 = vpack.c.b16 %v1806, %v1805
        %v1814 = vpack.c.b16 %v1808, %v1807
        %v1815 = vpack.c.b16 %v1810, %v1809
        %v1816 = vpack.c.b16 %v1812, %v1811
        %v1822 = vsel %vm344, %v1027, 0
        %v1825 = vsel %vm344, %v1028, 0
        %v1828 = vsel %vm344, %v1029, 0
        %v1831 = vsel %vm344, %v1030, 0
        %v1834 = vsel %vm344, %v1031, 0
        %v1837 = vsel %vm344, %v1032, 0
        %v1840 = vsel %vm344, %v1033, 0
        %v1843 = vsel %vm344, %v1034, 0
        %1845 = vmatprep.subr.bf16.mxu0 0
        %1846 = vmatpush1.bf16.msra.mxu0 %v1813
        %1847 = vmatprep.subr.bf16.mxu0 0
        %1848 = vmatpush1.bf16.msra.mxu0 %v1814
        %1849 = vmatprep.subr.bf16.mxu0 0
        %1850 = vmatpush1.bf16.msra.mxu0 %v1815
        %1851 = vmatprep.subr.bf16.mxu0 0
        %1852 = vmatpush1.bf16.msra.mxu0 %v1816
        %1853 = vmatprep.subr.bf16.mxu0 0
        %1854 = vmatpush1.bf16.msra.mxu0 0
        %1855 = vmatprep.subr.bf16.mxu0 0
        %1856 = vmatpush1.bf16.msra.mxu0 0
        %1857 = vmatprep.subr.bf16.mxu0 0
        %1858 = vmatpush1.bf16.msra.mxu0 0
        %1859 = vmatprep.subr.bf16.mxu0 0
        %1860 = vmatpush1.bf16.msra.mxu0 0
        %1861 = vmatprep.subr.bf16.mxu0 0
        %1862 = vmatpush1.bf16.msra.mxu0 0
        %1863 = vmatprep.subr.bf16.mxu0 0
        %1864 = vmatpush1.bf16.msra.mxu0 0
        %1865 = vmatprep.subr.bf16.mxu0 0
        %1866 = vmatpush1.bf16.msra.mxu0 0
        %1867 = vmatprep.subr.bf16.mxu0 0
        %1868 = vmatpush1.bf16.msra.mxu0 0
        %1869 = vmatprep.subr.bf16.mxu0 0
        %1870 = vmatpush1.bf16.msra.mxu0 0
        %1871 = vmatprep.subr.bf16.mxu0 0
        %1872 = vmatpush1.bf16.msra.mxu0 0
        %1873 = vmatprep.subr.bf16.mxu0 0
        %1874 = vmatpush1.bf16.msra.mxu0 0
        %1875 = vmatprep.subr.bf16.mxu0 0
        %1876 = vmatpush1.bf16.msra.mxu0 0
        %1877 = vmatprep.mubr.bf16.mxu0 0
        %1878 = vmatmul.mubr.bf16.gmra.mrb[0].mxu0 %v1822
        %v1879 = vpop.f32.mrb[0].mxu0
        %v1880 = vadd.f32 %v1750, %v1879
        %v1881 = vpop.f32.mrb[0].mxu0
        %v1882 = vpop.f32.mrb[0].mxu0
        %v1883 = vpop.f32.mrb[0].mxu0
        %1884 = vmatprep.mubr.bf16.mxu0 0
        %1885 = vmatmul.mubr.bf16.gmra.mrb[0].mxu0 %v1825
        %v1886 = vpop.f32.mrb[0].mxu0
        %v1887 = vpop.f32.mrb[0].mxu0
        %v1888 = vpop.f32.mrb[0].mxu0
        %v1889 = vpop.f32.mrb[0].mxu0
        %1890 = vmatprep.mubr.bf16.mxu0 0
        %1891 = vmatmul.mubr.bf16.gmra.mrb[0].mxu0 %v1828
        %v1892 = vpop.f32.mrb[0].mxu0
        %v1893 = vpop.f32.mrb[0].mxu0
        %v1894 = vpop.f32.mrb[0].mxu0
        %v1895 = vpop.f32.mrb[0].mxu0
        %1896 = vmatprep.mubr.bf16.mxu0 0
        %1897 = vmatmul.mubr.bf16.gmra.mrb[0].mxu0 %v1831
        %v1898 = vpop.f32.mrb[0].mxu0
        %v1899 = vpop.f32.mrb[0].mxu0
        %v1900 = vpop.f32.mrb[0].mxu0
        %v1901 = vpop.f32.mrb[0].mxu0
        %1902 = vmatprep.mubr.bf16.mxu0 0
        %1903 = vmatmul.mubr.bf16.gmra.mrb[0].mxu0 %v1834
        %v1904 = vpop.f32.mrb[0].mxu0
        %v1905 = vpop.f32.mrb[0].mxu0
        %v1906 = vpop.f32.mrb[0].mxu0
        %v1907 = vpop.f32.mrb[0].mxu0
        %1908 = vmatprep.mubr.bf16.mxu0 0
        %1909 = vmatmul.mubr.bf16.gmra.mrb[0].mxu0 %v1837
        %v1910 = vpop.f32.mrb[0].mxu0
        %v1911 = vpop.f32.mrb[0].mxu0
        %v1912 = vpop.f32.mrb[0].mxu0
        %v1913 = vpop.f32.mrb[0].mxu0
        %1914 = vmatprep.mubr.bf16.mxu0 0
        %1915 = vmatmul.mubr.bf16.gmra.mrb[0].mxu0 %v1840
        %v1916 = vpop.f32.mrb[0].mxu0
        %v1917 = vpop.f32.mrb[0].mxu0
        %v1918 = vpop.f32.mrb[0].mxu0
        %v1919 = vpop.f32.mrb[0].mxu0
        %1920 = vmatprep.mubr.bf16.mxu0 0
        %1921 = vmatmul.mubr.bf16.gmra.mrb[0].mxu0 %v1843
        %v1922 = vpop.f32.mrb[0].mxu0
        %v1923 = vpop.f32.mrb[0].mxu0
        %v1924 = vpop.f32.mrb[0].mxu0
        %v1925 = vpop.f32.mrb[0].mxu0
        %1926 = vdwg.mxu0
        %v1927 = vadd.f32 %v328, %v1880
        %1928 = vst.msk [vmem:[%s326] sm:$0xff] %vm344, %v1927
        %s1929 = sand.u32 %s165, 1
        %s1930 = scalar_lea.sflag [#allocation5], %s1929
        %s1931 = sand.u32 %s165, 1
        %s1932 = smul.addr %s1931, 8
        %s1933 = scalar_lea.vmem [#allocation12], %s1932
        // Predicated region
        $region65: #{latent_attention_block.1} parent=43 // pred_check
          %p1934 = pneg %p175
        $region66: #{latent_attention_block.1} parent=43 // pred_check_branch
          %1936 = sbr.rel (%p1934) target = $region68
        $region67: #{latent_attention_block.1} parent=43 // pred_region
          %s1938 = ssub.s32 128, 128
          %1939 = vsyncadd %s1930, %s1938
          %s1940 = smul.addr %s26, 128
          %s1941 = scalar_lea.hbm %s6, %s1940
          %s1943 = sshll.u32 %s1933, 4
          %s1944 = int_to_ptr.vmem [resolvable:$true] %s1943
          %1946 = dma.vmem_to_hbm [thread:$0]  %s1944, 128, %s1941, %s1930
        $region68: #{latent_attention_block.1} parent=43 // pred_fallthru
          _
      $region44: #{latent_attention_block.1} parent=5 // pred_fallthru
        _
      %p1947 = scmp.le.s32.totalorder 2, %s21
      // Predicated region
      $region69: #{latent_attention_block.1} parent=5 // pred_check
        %p1948 = pneg %p1947
      $region70: #{latent_attention_block.1} parent=5 // pred_check_branch
        %1950 = sbr.rel (%p1948) target = $region72
      $region71: #{latent_attention_block.1} parent=5 // pred_region
        %s1951 = ssub.s32 %s21, 2
        // Predicated region
        $region73: #{latent_attention_block.1} parent=71 // pred_check
          %p1952 = pneg %p181
        $region74: #{latent_attention_block.1} parent=71 // pred_check_branch
          %1954 = sbr.rel (%p1952) target = $region76
        $region75: #{latent_attention_block.1} parent=71 // pred_region
          %s1955 = sand.u32 %s166, 1
          %s1956 = scalar_lea.sflag [#allocation5], %s1955
          %s1957 = sand.u32 %s166, 1
          %s1958 = smul.addr %s1957, 8
          %s1959 = scalar_lea.vmem [#allocation12], %s1958
          %1960 = dma.done %s1956, 128
        $region76: #{latent_attention_block.1} parent=71 // pred_fallthru
          _
      $region72: #{latent_attention_block.1} parent=5 // pred_fallthru
        _
    $region6: #{latent_attention_block.1} parent=1 // loop_footer
      %s25 = sadd.s32 1, %s21
    $region7: #{latent_attention_block.1} parent=1 // loop_footer_branch
      %20 = sbr.rel target = $region3
    $region8: #{latent_attention_block.1} parent=1 // loop_exit
      _
    %1961 = vsyncpa [#allocation4], 1
    %s1962 = scalar_lea.sflag [#allocation4], 1
    %1963 = vsyncpa %s1962, 1
    %1964 = vsyncpa [#allocation7], 1
    %1965 = vsyncpa [#allocation10], 1
    %1966 = vsyncpa [#allocation5], 1
    %s1967 = scalar_lea.sflag [#allocation5], 1
    %1968 = vsyncpa %s1967, 1

</llo_original>
